<compile_context>
chip_gen: v7x
topology: tpu7x:2x2x1
jax: 0.10.0
libtpu: 0.0.40
codegen_flags: <defaults>
</compile_context>

<pallas_src>
import jax
import jax.numpy as jnp
from jax import lax
from jax.experimental import pallas as pl
from jax.experimental.pallas import tpu as pltpu

NUM_CLASSES = 80
NUM_HIDDEN = 100
EMB_DIM = 8

HP = 128          # hidden, padded to one 128-lane block per gate
CP = 128          # classes, padded to one 128-lane block
GATE_PERM = (0, 1, 3, 2)   # PyTorch gate order (i, f, g, o) -> packed order (i, f, o, g)


def _round_up(x, m):
    return (x + m - 1) // m * m


# -----------------------------------------------------------------------------
# Kernel: in-kernel token gather (one-hot matmul) + full LSTM recurrence + FC.
# -----------------------------------------------------------------------------
def lstm_fc_kernel(tok_ref, h0_ref, c0_ref, emb_ref, whh_ref, wfc_ref, bfc_ref,
                   logits_ref, hn_ref, cn_ref):
    """tok_ref : [T, Bp, 1]  int32  padded tokens
       h0/c0   : [Bp, HP]    f32
       emb_ref : [CP, 4*HP]  bf16   folded emb @ W_ih + (b_ih + b_hh), gate order i,f,o,g
       whh_ref : [HP, 4*HP]  bf16
       wfc_ref : [HP, CP]    bf16
       bfc_ref : [1, CP]     f32
       logits  : [Bp, CP]    f32
       hn, cn  : [Bp, HP]    f32
    """
    T = tok_ref.shape[0]
    Bp = h0_ref.shape[0]

    # Hoisted loop-invariant lane indices for the one-hot build.
    lane = lax.broadcasted_iota(jnp.int32, (Bp, CP), 1)

    def step(t, carry):
        h, c = carry
        tok = tok_ref[t]                                         # [Bp, 1] int32
        onehot = jnp.where(tok == lane,
                           jnp.float32(1.0), jnp.float32(0.0)).astype(jnp.bfloat16)
        # Token half (off the h->h critical path) + recurrent half; f32 accumulate.
        z = (jnp.dot(onehot, emb_ref[...], preferred_element_type=jnp.float32)
             + jnp.dot(h.astype(jnp.bfloat16), whh_ref[...],
                       preferred_element_type=jnp.float32))      # [Bp, 4*HP]
        # sigmoid(x) = 0.5*(tanh(0.5*x)+1): one EUP op per vreg for the i,f,o gates.
        ifo = 0.5 * (jnp.tanh(0.5 * z[:, :3 * HP]) + 1.0)
        g = jnp.tanh(z[:, 3 * HP:])
        i_g = ifo[:, :HP]
        f_g = ifo[:, HP:2 * HP]
        o_g = ifo[:, 2 * HP:3 * HP]
        c_new = f_g * c + i_g * g
        h_new = o_g * jnp.tanh(c_new)
        return (h_new, c_new)

    unroll = True if T <= 16 else 8
    h, c = lax.fori_loop(0, T, step, (h0_ref[...], c0_ref[...]), unroll=unroll)

    hn_ref[...] = h
    cn_ref[...] = c
    logits_ref[...] = (jnp.dot(h.astype(jnp.bfloat16), wfc_ref[...],
                               preferred_element_type=jnp.float32) + bfc_ref[...])


# -----------------------------------------------------------------------------
# Parameters: raw (PyTorch-layout) + packed/padded/bf16 kernel params.
# -----------------------------------------------------------------------------
def init_params(key):
    """Raw synthetic parameters matching Shakespeare_Net shapes (gate order i,f,g,o)."""
    k_emb, k_wih, k_whh, k_bih, k_bhh, k_wfc, k_bfc = jax.random.split(key, 7)
    H, E, C = NUM_HIDDEN, EMB_DIM, NUM_CLASSES
    scale = 0.1
    emb = scale * jax.random.normal(k_emb, (C, E), jnp.float32)
    w_ih = scale * jax.random.normal(k_wih, (4, E, H), jnp.float32)   # weight_ih_l0 split
    w_hh = scale * jax.random.normal(k_whh, (4, H, H), jnp.float32)   # weight_hh_l0 split
    b_ih = scale * jax.random.normal(k_bih, (4, 1, H), jnp.float32)
    b_hh = scale * jax.random.normal(k_bhh, (4, 1, H), jnp.float32)
    w_fc = scale * jax.random.normal(k_wfc, (H, C), jnp.float32)      # fc.weight.T
    b_fc = scale * jax.random.normal(k_bfc, (1, C), jnp.float32)
    return dict(emb=emb, w_ih=w_ih, w_hh=w_hh, b=b_ih + b_hh, w_fc=w_fc, b_fc=b_fc)


def pack_params(raw):
    """Build padded, packed, fused parameters for the kernel (weights in bf16)."""
    H, C, E = NUM_HIDDEN, NUM_CLASSES, EMB_DIM

    w_ih_packed = jnp.zeros((E, 4 * HP), jnp.float32)
    w_hh_packed = jnp.zeros((HP, 4 * HP), jnp.float32)
    b_packed = jnp.zeros((1, 4 * HP), jnp.float32)
    for dst, src in enumerate(GATE_PERM):
        w_ih_packed = w_ih_packed.at[:, dst * HP:dst * HP + H].set(raw["w_ih"][src])
        w_hh_packed = w_hh_packed.at[:H, dst * HP:dst * HP + H].set(raw["w_hh"][src])
        b_packed = b_packed.at[:, dst * HP:dst * HP + H].set(raw["b"][src])

    # Fold input projection + bias into the embedding table, padded to [CP, 4*HP].
    emb_folded = jnp.zeros((CP, 4 * HP), jnp.float32).at[:C].set(
        raw["emb"] @ w_ih_packed + b_packed)

    w_fc_packed = jnp.zeros((HP, CP), jnp.float32).at[:H, :C].set(raw["w_fc"])
    b_fc_packed = jnp.zeros((1, CP), jnp.float32).at[:, :C].set(raw["b_fc"])

    return dict(emb_folded=emb_folded.astype(jnp.bfloat16),
                w_hh=w_hh_packed.astype(jnp.bfloat16),
                w_fc=w_fc_packed.astype(jnp.bfloat16),
                b_fc=b_fc_packed)


# -----------------------------------------------------------------------------
# Forward wrapper (= Shakespeare_Net.forward)
# -----------------------------------------------------------------------------
def shakespeare_forward(packed, x_tokens, prev_state):
    """x_tokens   : [B, T] int32
       prev_state : (h0, c0), each [1, B, H] float32
       returns    : (logits [B, C], (h_n [1, B, H], c_n [1, B, H]))
    """
    h0, c0 = prev_state
    B, T = x_tokens.shape
    H, C = NUM_HIDDEN, NUM_CLASSES
    Bp = _round_up(max(B, 8), 8)

    # Tokens in [T, Bp, 1] layout: batch on sublanes, singleton lane dim that is
    # lane-broadcast against the one-hot iota inside the kernel.
    tok_tb = x_tokens.T.astype(jnp.int32)                         # [T, B]
    if Bp != B:
        tok_tb = jnp.pad(tok_tb, ((0, 0), (0, Bp - B)))
    tok = tok_tb[:, :, None]                                      # [T, Bp, 1]

    h0p = jnp.zeros((Bp, HP), jnp.float32).at[:B, :H].set(h0[0])
    c0p = jnp.zeros((Bp, HP), jnp.float32).at[:B, :H].set(c0[0])

    vmem = pl.BlockSpec(memory_space=pltpu.MemorySpace.VMEM)
    out_shapes = (
        jax.ShapeDtypeStruct((Bp, CP), jnp.float32),
        jax.ShapeDtypeStruct((Bp, HP), jnp.float32),
        jax.ShapeDtypeStruct((Bp, HP), jnp.float32),
    )

    logits_p, hn_p, cn_p = pl.pallas_call(
        lstm_fc_kernel,
        out_shape=out_shapes,
        in_specs=[vmem] * 7,
        out_specs=(vmem, vmem, vmem),
    )(tok, h0p, c0p, packed["emb_folded"], packed["w_hh"],
      packed["w_fc"], packed["b_fc"])

    logits = logits_p[:B, :C]
    h_n = hn_p[:B, :H][None, ...]
    c_n = cn_p[:B, :H][None, ...]
    return logits, (h_n, c_n)


def zero_state(batch_size):
    return (jnp.zeros((1, batch_size, NUM_HIDDEN), jnp.float32),
            jnp.zeros((1, batch_size, NUM_HIDDEN), jnp.float32))


# -----------------------------------------------------------------------------
# Pure-JAX reference (PyTorch LSTM semantics, f32) for correctness checking.
# -----------------------------------------------------------------------------
def reference_forward(raw, x_tokens, prev_state):
    h = prev_state[0][0]
    c = prev_state[1][0]
    emb = jnp.take(raw["emb"], x_tokens, axis=0)   # [B, T, E]
    T = x_tokens.shape[1]
    for t in range(T):
        x_t = emb[:, t, :]
        gates = [x_t @ raw["w_ih"][g] + h @ raw["w_hh"][g] + raw["b"][g]
                 for g in range(4)]
        i = jax.nn.sigmoid(gates[0])
        f = jax.nn.sigmoid(gates[1])
        g = jnp.tanh(gates[2])
        o = jax.nn.sigmoid(gates[3])
        c = f * c + i * g
        h = o * jnp.tanh(c)
    logits = h @ raw["w_fc"] + raw["b_fc"]
    return logits, (h[None], c[None])


if __name__ == "__main__":
    key = jax.random.PRNGKey(0)
    k_params, k_tokens = jax.random.split(key)

    raw = init_params(k_params)
    packed = pack_params(raw)

    B, T = 4, 8  # small shapes; module default SEQ_LEN=80 also works
    x = jax.random.randint(k_tokens, (B, T), 0, NUM_CLASSES, dtype=jnp.int32)
    state0 = zero_state(B)

    logits, (h_n, c_n) = shakespeare_forward(packed, x, state0)
    jax.block_until_ready((logits, h_n, c_n))

    ref_logits, (ref_h, ref_c) = reference_forward(raw, x, state0)
    assert logits.shape == (B, NUM_CLASSES)
    assert h_n.shape == (1, B, NUM_HIDDEN) and c_n.shape == (1, B, NUM_HIDDEN)
    # bf16 weight storage -> loosened tolerances vs the f32 reference.
    assert jnp.allclose(logits, ref_logits, atol=2e-2), \
        float(jnp.max(jnp.abs(logits - ref_logits)))
    assert jnp.allclose(h_n, ref_h, atol=1e-2)
    assert jnp.allclose(c_n, ref_c, atol=1e-2)

    print("KERNEL_OK")
</pallas_src>

<mosaic_0001>
module attributes {stable_mosaic.version = 11 : i64} {
  func.func @lstm_fc_kernel(%arg0: memref<8x8x1xi32, #tpu.memory_space<vmem>>, %arg1: memref<8x128xf32, #tpu.memory_space<vmem>>, %arg2: memref<8x128xf32, #tpu.memory_space<vmem>>, %arg3: memref<128x512xbf16, #tpu.memory_space<vmem>>, %arg4: memref<128x512xbf16, #tpu.memory_space<vmem>>, %arg5: memref<128x128xbf16, #tpu.memory_space<vmem>>, %arg6: memref<1x128xf32, #tpu.memory_space<vmem>>, %arg7: memref<8x128xf32, #tpu.memory_space<vmem>>, %arg8: memref<8x128xf32, #tpu.memory_space<vmem>>, %arg9: memref<8x128xf32, #tpu.memory_space<vmem>>) attributes {dimension_semantics = [], scalar_prefetch = 0 : i64, scratch_operands = 0 : i64, tpu.core_type = #tpu.core_type<tc>} {
    %0 = tpu.iota {dimensions = array<i32: 1>} : vector<8x128xi32>
    %c0 = arith.constant 0 : index
    %c0_0 = arith.constant 0 : index
    %1 = vector.load %arg1[%c0, %c0_0] : memref<8x128xf32, #tpu.memory_space<vmem>>, vector<8x128xf32>
    %c0_1 = arith.constant 0 : index
    %c0_2 = arith.constant 0 : index
    %2 = vector.load %arg2[%c0_1, %c0_2] : memref<8x128xf32, #tpu.memory_space<vmem>>, vector<8x128xf32>
    %c0_i32 = arith.constant 0 : i32
    %3 = arith.index_cast %c0_i32 : i32 to index
    %c0_3 = arith.constant 0 : index
    %c0_4 = arith.constant 0 : index
    %4 = vector.load %arg0[%3, %c0_3, %c0_4] : memref<8x8x1xi32, #tpu.memory_space<vmem>>, vector<1x8x1xi32>
    %5 = vector.shape_cast %4 : vector<1x8x1xi32> to vector<8x1xi32>
    %6 = vector.broadcast %5 : vector<8x1xi32> to vector<8x128xi32>
    %7 = arith.cmpi eq, %6, %0 : vector<8x128xi32>
    %cst = arith.constant 1.000000e+00 : f32
    %cst_5 = arith.constant 0.000000e+00 : f32
    %8 = vector.broadcast %cst : f32 to vector<8x128xf32>
    %9 = vector.broadcast %cst_5 : f32 to vector<8x128xf32>
    %10 = arith.select %7, %8, %9 : vector<8x128xi1>, vector<8x128xf32>
    %11 = arith.truncf %10 : vector<8x128xf32> to vector<8x128xbf16>
    %c0_6 = arith.constant 0 : index
    %c0_7 = arith.constant 0 : index
    %12 = vector.load %arg3[%c0_6, %c0_7] : memref<128x512xbf16, #tpu.memory_space<vmem>>, vector<128x512xbf16>
    %cst_8 = arith.constant dense<0.000000e+00> : vector<8x512xf32>
    %13 = tpu.matmul %11, %12, %cst_8 {dimension_numbers = #tpu.dot_dimension_numbers<[1], [0], [0], [1], [0, 0, 1, 1], [], []>} : vector<8x128xbf16>, vector<128x512xbf16>, vector<8x512xf32> -> vector<8x512xf32>
    %14 = arith.truncf %1 : vector<8x128xf32> to vector<8x128xbf16>
    %c0_9 = arith.constant 0 : index
    %c0_10 = arith.constant 0 : index
    %15 = vector.load %arg4[%c0_9, %c0_10] : memref<128x512xbf16, #tpu.memory_space<vmem>>, vector<128x512xbf16>
    %cst_11 = arith.constant dense<0.000000e+00> : vector<8x512xf32>
    %16 = tpu.matmul %14, %15, %cst_11 {dimension_numbers = #tpu.dot_dimension_numbers<[1], [0], [0], [1], [0, 0, 1, 1], [], []>} : vector<8x128xbf16>, vector<128x512xbf16>, vector<8x512xf32> -> vector<8x512xf32>
    %17 = arith.addf %13, %16 : vector<8x512xf32>
    %18 = vector.extract_strided_slice %17 {offsets = [0, 0], sizes = [8, 384], strides = [1, 1]} : vector<8x512xf32> to vector<8x384xf32>
    %cst_12 = arith.constant 5.000000e-01 : f32
    %19 = vector.broadcast %cst_12 : f32 to vector<8x384xf32>
    %20 = arith.mulf %19, %18 : vector<8x384xf32>
    %21 = math.tanh %20 : vector<8x384xf32>
    %cst_13 = arith.constant 1.000000e+00 : f32
    %22 = vector.broadcast %cst_13 : f32 to vector<8x384xf32>
    %23 = arith.addf %21, %22 : vector<8x384xf32>
    %cst_14 = arith.constant 5.000000e-01 : f32
    %24 = vector.broadcast %cst_14 : f32 to vector<8x384xf32>
    %25 = arith.mulf %24, %23 : vector<8x384xf32>
    %26 = vector.extract_strided_slice %17 {offsets = [0, 384], sizes = [8, 128], strides = [1, 1]} : vector<8x512xf32> to vector<8x128xf32>
    %27 = math.tanh %26 : vector<8x128xf32>
    %28 = vector.extract_strided_slice %25 {offsets = [0, 0], sizes = [8, 128], strides = [1, 1]} : vector<8x384xf32> to vector<8x128xf32>
    %29 = vector.extract_strided_slice %25 {offsets = [0, 128], sizes = [8, 128], strides = [1, 1]} : vector<8x384xf32> to vector<8x128xf32>
    %30 = vector.extract_strided_slice %25 {offsets = [0, 256], sizes = [8, 128], strides = [1, 1]} : vector<8x384xf32> to vector<8x128xf32>
    %31 = arith.mulf %29, %2 : vector<8x128xf32>
    %32 = arith.mulf %28, %27 : vector<8x128xf32>
    %33 = arith.addf %31, %32 : vector<8x128xf32>
    %34 = math.tanh %33 : vector<8x128xf32>
    %35 = arith.mulf %30, %34 : vector<8x128xf32>
    %c1_i32 = arith.constant 1 : i32
    %36 = arith.index_cast %c1_i32 : i32 to index
    %c0_15 = arith.constant 0 : index
    %c0_16 = arith.constant 0 : index
    %37 = vector.load %arg0[%36, %c0_15, %c0_16] : memref<8x8x1xi32, #tpu.memory_space<vmem>>, vector<1x8x1xi32>
    %38 = vector.shape_cast %37 : vector<1x8x1xi32> to vector<8x1xi32>
    %39 = vector.broadcast %38 : vector<8x1xi32> to vector<8x128xi32>
    %40 = arith.cmpi eq, %39, %0 : vector<8x128xi32>
    %cst_17 = arith.constant 1.000000e+00 : f32
    %cst_18 = arith.constant 0.000000e+00 : f32
    %41 = vector.broadcast %cst_17 : f32 to vector<8x128xf32>
    %42 = vector.broadcast %cst_18 : f32 to vector<8x128xf32>
    %43 = arith.select %40, %41, %42 : vector<8x128xi1>, vector<8x128xf32>
    %44 = arith.truncf %43 : vector<8x128xf32> to vector<8x128xbf16>
    %c0_19 = arith.constant 0 : index
    %c0_20 = arith.constant 0 : index
    %45 = vector.load %arg3[%c0_19, %c0_20] : memref<128x512xbf16, #tpu.memory_space<vmem>>, vector<128x512xbf16>
    %cst_21 = arith.constant dense<0.000000e+00> : vector<8x512xf32>
    %46 = tpu.matmul %44, %45, %cst_21 {dimension_numbers = #tpu.dot_dimension_numbers<[1], [0], [0], [1], [0, 0, 1, 1], [], []>} : vector<8x128xbf16>, vector<128x512xbf16>, vector<8x512xf32> -> vector<8x512xf32>
    %47 = arith.truncf %35 : vector<8x128xf32> to vector<8x128xbf16>
    %c0_22 = arith.constant 0 : index
    %c0_23 = arith.constant 0 : index
    %48 = vector.load %arg4[%c0_22, %c0_23] : memref<128x512xbf16, #tpu.memory_space<vmem>>, vector<128x512xbf16>
    %cst_24 = arith.constant dense<0.000000e+00> : vector<8x512xf32>
    %49 = tpu.matmul %47, %48, %cst_24 {dimension_numbers = #tpu.dot_dimension_numbers<[1], [0], [0], [1], [0, 0, 1, 1], [], []>} : vector<8x128xbf16>, vector<128x512xbf16>, vector<8x512xf32> -> vector<8x512xf32>
    %50 = arith.addf %46, %49 : vector<8x512xf32>
    %51 = vector.extract_strided_slice %50 {offsets = [0, 0], sizes = [8, 384], strides = [1, 1]} : vector<8x512xf32> to vector<8x384xf32>
    %cst_25 = arith.constant 5.000000e-01 : f32
    %52 = vector.broadcast %cst_25 : f32 to vector<8x384xf32>
    %53 = arith.mulf %52, %51 : vector<8x384xf32>
    %54 = math.tanh %53 : vector<8x384xf32>
    %cst_26 = arith.constant 1.000000e+00 : f32
    %55 = vector.broadcast %cst_26 : f32 to vector<8x384xf32>
    %56 = arith.addf %54, %55 : vector<8x384xf32>
    %cst_27 = arith.constant 5.000000e-01 : f32
    %57 = vector.broadcast %cst_27 : f32 to vector<8x384xf32>
    %58 = arith.mulf %57, %56 : vector<8x384xf32>
    %59 = vector.extract_strided_slice %50 {offsets = [0, 384], sizes = [8, 128], strides = [1, 1]} : vector<8x512xf32> to vector<8x128xf32>
    %60 = math.tanh %59 : vector<8x128xf32>
    %61 = vector.extract_strided_slice %58 {offsets = [0, 0], sizes = [8, 128], strides = [1, 1]} : vector<8x384xf32> to vector<8x128xf32>
    %62 = vector.extract_strided_slice %58 {offsets = [0, 128], sizes = [8, 128], strides = [1, 1]} : vector<8x384xf32> to vector<8x128xf32>
    %63 = vector.extract_strided_slice %58 {offsets = [0, 256], sizes = [8, 128], strides = [1, 1]} : vector<8x384xf32> to vector<8x128xf32>
    %64 = arith.mulf %62, %33 : vector<8x128xf32>
    %65 = arith.mulf %61, %60 : vector<8x128xf32>
    %66 = arith.addf %64, %65 : vector<8x128xf32>
    %67 = math.tanh %66 : vector<8x128xf32>
    %68 = arith.mulf %63, %67 : vector<8x128xf32>
    %c2_i32 = arith.constant 2 : i32
    %69 = arith.index_cast %c2_i32 : i32 to index
    %c0_28 = arith.constant 0 : index
    %c0_29 = arith.constant 0 : index
    %70 = vector.load %arg0[%69, %c0_28, %c0_29] : memref<8x8x1xi32, #tpu.memory_space<vmem>>, vector<1x8x1xi32>
    %71 = vector.shape_cast %70 : vector<1x8x1xi32> to vector<8x1xi32>
    %72 = vector.broadcast %71 : vector<8x1xi32> to vector<8x128xi32>
    %73 = arith.cmpi eq, %72, %0 : vector<8x128xi32>
    %cst_30 = arith.constant 1.000000e+00 : f32
    %cst_31 = arith.constant 0.000000e+00 : f32
    %74 = vector.broadcast %cst_30 : f32 to vector<8x128xf32>
    %75 = vector.broadcast %cst_31 : f32 to vector<8x128xf32>
    %76 = arith.select %73, %74, %75 : vector<8x128xi1>, vector<8x128xf32>
    %77 = arith.truncf %76 : vector<8x128xf32> to vector<8x128xbf16>
    %c0_32 = arith.constant 0 : index
    %c0_33 = arith.constant 0 : index
    %78 = vector.load %arg3[%c0_32, %c0_33] : memref<128x512xbf16, #tpu.memory_space<vmem>>, vector<128x512xbf16>
    %cst_34 = arith.constant dense<0.000000e+00> : vector<8x512xf32>
    %79 = tpu.matmul %77, %78, %cst_34 {dimension_numbers = #tpu.dot_dimension_numbers<[1], [0], [0], [1], [0, 0, 1, 1], [], []>} : vector<8x128xbf16>, vector<128x512xbf16>, vector<8x512xf32> -> vector<8x512xf32>
    %80 = arith.truncf %68 : vector<8x128xf32> to vector<8x128xbf16>
    %c0_35 = arith.constant 0 : index
    %c0_36 = arith.constant 0 : index
    %81 = vector.load %arg4[%c0_35, %c0_36] : memref<128x512xbf16, #tpu.memory_space<vmem>>, vector<128x512xbf16>
    %cst_37 = arith.constant dense<0.000000e+00> : vector<8x512xf32>
    %82 = tpu.matmul %80, %81, %cst_37 {dimension_numbers = #tpu.dot_dimension_numbers<[1], [0], [0], [1], [0, 0, 1, 1], [], []>} : vector<8x128xbf16>, vector<128x512xbf16>, vector<8x512xf32> -> vector<8x512xf32>
    %83 = arith.addf %79, %82 : vector<8x512xf32>
    %84 = vector.extract_strided_slice %83 {offsets = [0, 0], sizes = [8, 384], strides = [1, 1]} : vector<8x512xf32> to vector<8x384xf32>
    %cst_38 = arith.constant 5.000000e-01 : f32
    %85 = vector.broadcast %cst_38 : f32 to vector<8x384xf32>
    %86 = arith.mulf %85, %84 : vector<8x384xf32>
    %87 = math.tanh %86 : vector<8x384xf32>
    %cst_39 = arith.constant 1.000000e+00 : f32
    %88 = vector.broadcast %cst_39 : f32 to vector<8x384xf32>
    %89 = arith.addf %87, %88 : vector<8x384xf32>
    %cst_40 = arith.constant 5.000000e-01 : f32
    %90 = vector.broadcast %cst_40 : f32 to vector<8x384xf32>
    %91 = arith.mulf %90, %89 : vector<8x384xf32>
    %92 = vector.extract_strided_slice %83 {offsets = [0, 384], sizes = [8, 128], strides = [1, 1]} : vector<8x512xf32> to vector<8x128xf32>
    %93 = math.tanh %92 : vector<8x128xf32>
    %94 = vector.extract_strided_slice %91 {offsets = [0, 0], sizes = [8, 128], strides = [1, 1]} : vector<8x384xf32> to vector<8x128xf32>
    %95 = vector.extract_strided_slice %91 {offsets = [0, 128], sizes = [8, 128], strides = [1, 1]} : vector<8x384xf32> to vector<8x128xf32>
    %96 = vector.extract_strided_slice %91 {offsets = [0, 256], sizes = [8, 128], strides = [1, 1]} : vector<8x384xf32> to vector<8x128xf32>
    %97 = arith.mulf %95, %66 : vector<8x128xf32>
    %98 = arith.mulf %94, %93 : vector<8x128xf32>
    %99 = arith.addf %97, %98 : vector<8x128xf32>
    %100 = math.tanh %99 : vector<8x128xf32>
    %101 = arith.mulf %96, %100 : vector<8x128xf32>
    %c3_i32 = arith.constant 3 : i32
    %102 = arith.index_cast %c3_i32 : i32 to index
    %c0_41 = arith.constant 0 : index
    %c0_42 = arith.constant 0 : index
    %103 = vector.load %arg0[%102, %c0_41, %c0_42] : memref<8x8x1xi32, #tpu.memory_space<vmem>>, vector<1x8x1xi32>
    %104 = vector.shape_cast %103 : vector<1x8x1xi32> to vector<8x1xi32>
    %105 = vector.broadcast %104 : vector<8x1xi32> to vector<8x128xi32>
    %106 = arith.cmpi eq, %105, %0 : vector<8x128xi32>
    %cst_43 = arith.constant 1.000000e+00 : f32
    %cst_44 = arith.constant 0.000000e+00 : f32
    %107 = vector.broadcast %cst_43 : f32 to vector<8x128xf32>
    %108 = vector.broadcast %cst_44 : f32 to vector<8x128xf32>
    %109 = arith.select %106, %107, %108 : vector<8x128xi1>, vector<8x128xf32>
    %110 = arith.truncf %109 : vector<8x128xf32> to vector<8x128xbf16>
    %c0_45 = arith.constant 0 : index
    %c0_46 = arith.constant 0 : index
    %111 = vector.load %arg3[%c0_45, %c0_46] : memref<128x512xbf16, #tpu.memory_space<vmem>>, vector<128x512xbf16>
    %cst_47 = arith.constant dense<0.000000e+00> : vector<8x512xf32>
    %112 = tpu.matmul %110, %111, %cst_47 {dimension_numbers = #tpu.dot_dimension_numbers<[1], [0], [0], [1], [0, 0, 1, 1], [], []>} : vector<8x128xbf16>, vector<128x512xbf16>, vector<8x512xf32> -> vector<8x512xf32>
    %113 = arith.truncf %101 : vector<8x128xf32> to vector<8x128xbf16>
    %c0_48 = arith.constant 0 : index
    %c0_49 = arith.constant 0 : index
    %114 = vector.load %arg4[%c0_48, %c0_49] : memref<128x512xbf16, #tpu.memory_space<vmem>>, vector<128x512xbf16>
    %cst_50 = arith.constant dense<0.000000e+00> : vector<8x512xf32>
    %115 = tpu.matmul %113, %114, %cst_50 {dimension_numbers = #tpu.dot_dimension_numbers<[1], [0], [0], [1], [0, 0, 1, 1], [], []>} : vector<8x128xbf16>, vector<128x512xbf16>, vector<8x512xf32> -> vector<8x512xf32>
    %116 = arith.addf %112, %115 : vector<8x512xf32>
    %117 = vector.extract_strided_slice %116 {offsets = [0, 0], sizes = [8, 384], strides = [1, 1]} : vector<8x512xf32> to vector<8x384xf32>
    %cst_51 = arith.constant 5.000000e-01 : f32
    %118 = vector.broadcast %cst_51 : f32 to vector<8x384xf32>
    %119 = arith.mulf %118, %117 : vector<8x384xf32>
    %120 = math.tanh %119 : vector<8x384xf32>
    %cst_52 = arith.constant 1.000000e+00 : f32
    %121 = vector.broadcast %cst_52 : f32 to vector<8x384xf32>
    %122 = arith.addf %120, %121 : vector<8x384xf32>
    %cst_53 = arith.constant 5.000000e-01 : f32
    %123 = vector.broadcast %cst_53 : f32 to vector<8x384xf32>
    %124 = arith.mulf %123, %122 : vector<8x384xf32>
    %125 = vector.extract_strided_slice %116 {offsets = [0, 384], sizes = [8, 128], strides = [1, 1]} : vector<8x512xf32> to vector<8x128xf32>
    %126 = math.tanh %125 : vector<8x128xf32>
    %127 = vector.extract_strided_slice %124 {offsets = [0, 0], sizes = [8, 128], strides = [1, 1]} : vector<8x384xf32> to vector<8x128xf32>
    %128 = vector.extract_strided_slice %124 {offsets = [0, 128], sizes = [8, 128], strides = [1, 1]} : vector<8x384xf32> to vector<8x128xf32>
    %129 = vector.extract_strided_slice %124 {offsets = [0, 256], sizes = [8, 128], strides = [1, 1]} : vector<8x384xf32> to vector<8x128xf32>
    %130 = arith.mulf %128, %99 : vector<8x128xf32>
    %131 = arith.mulf %127, %126 : vector<8x128xf32>
    %132 = arith.addf %130, %131 : vector<8x128xf32>
    %133 = math.tanh %132 : vector<8x128xf32>
    %134 = arith.mulf %129, %133 : vector<8x128xf32>
    %c4_i32 = arith.constant 4 : i32
    %135 = arith.index_cast %c4_i32 : i32 to index
    %c0_54 = arith.constant 0 : index
    %c0_55 = arith.constant 0 : index
    %136 = vector.load %arg0[%135, %c0_54, %c0_55] : memref<8x8x1xi32, #tpu.memory_space<vmem>>, vector<1x8x1xi32>
    %137 = vector.shape_cast %136 : vector<1x8x1xi32> to vector<8x1xi32>
    %138 = vector.broadcast %137 : vector<8x1xi32> to vector<8x128xi32>
    %139 = arith.cmpi eq, %138, %0 : vector<8x128xi32>
    %cst_56 = arith.constant 1.000000e+00 : f32
    %cst_57 = arith.constant 0.000000e+00 : f32
    %140 = vector.broadcast %cst_56 : f32 to vector<8x128xf32>
    %141 = vector.broadcast %cst_57 : f32 to vector<8x128xf32>
    %142 = arith.select %139, %140, %141 : vector<8x128xi1>, vector<8x128xf32>
    %143 = arith.truncf %142 : vector<8x128xf32> to vector<8x128xbf16>
    %c0_58 = arith.constant 0 : index
    %c0_59 = arith.constant 0 : index
    %144 = vector.load %arg3[%c0_58, %c0_59] : memref<128x512xbf16, #tpu.memory_space<vmem>>, vector<128x512xbf16>
    %cst_60 = arith.constant dense<0.000000e+00> : vector<8x512xf32>
    %145 = tpu.matmul %143, %144, %cst_60 {dimension_numbers = #tpu.dot_dimension_numbers<[1], [0], [0], [1], [0, 0, 1, 1], [], []>} : vector<8x128xbf16>, vector<128x512xbf16>, vector<8x512xf32> -> vector<8x512xf32>
    %146 = arith.truncf %134 : vector<8x128xf32> to vector<8x128xbf16>
    %c0_61 = arith.constant 0 : index
    %c0_62 = arith.constant 0 : index
    %147 = vector.load %arg4[%c0_61, %c0_62] : memref<128x512xbf16, #tpu.memory_space<vmem>>, vector<128x512xbf16>
    %cst_63 = arith.constant dense<0.000000e+00> : vector<8x512xf32>
    %148 = tpu.matmul %146, %147, %cst_63 {dimension_numbers = #tpu.dot_dimension_numbers<[1], [0], [0], [1], [0, 0, 1, 1], [], []>} : vector<8x128xbf16>, vector<128x512xbf16>, vector<8x512xf32> -> vector<8x512xf32>
    %149 = arith.addf %145, %148 : vector<8x512xf32>
    %150 = vector.extract_strided_slice %149 {offsets = [0, 0], sizes = [8, 384], strides = [1, 1]} : vector<8x512xf32> to vector<8x384xf32>
    %cst_64 = arith.constant 5.000000e-01 : f32
    %151 = vector.broadcast %cst_64 : f32 to vector<8x384xf32>
    %152 = arith.mulf %151, %150 : vector<8x384xf32>
    %153 = math.tanh %152 : vector<8x384xf32>
    %cst_65 = arith.constant 1.000000e+00 : f32
    %154 = vector.broadcast %cst_65 : f32 to vector<8x384xf32>
    %155 = arith.addf %153, %154 : vector<8x384xf32>
    %cst_66 = arith.constant 5.000000e-01 : f32
    %156 = vector.broadcast %cst_66 : f32 to vector<8x384xf32>
    %157 = arith.mulf %156, %155 : vector<8x384xf32>
    %158 = vector.extract_strided_slice %149 {offsets = [0, 384], sizes = [8, 128], strides = [1, 1]} : vector<8x512xf32> to vector<8x128xf32>
    %159 = math.tanh %158 : vector<8x128xf32>
    %160 = vector.extract_strided_slice %157 {offsets = [0, 0], sizes = [8, 128], strides = [1, 1]} : vector<8x384xf32> to vector<8x128xf32>
    %161 = vector.extract_strided_slice %157 {offsets = [0, 128], sizes = [8, 128], strides = [1, 1]} : vector<8x384xf32> to vector<8x128xf32>
    %162 = vector.extract_strided_slice %157 {offsets = [0, 256], sizes = [8, 128], strides = [1, 1]} : vector<8x384xf32> to vector<8x128xf32>
    %163 = arith.mulf %161, %132 : vector<8x128xf32>
    %164 = arith.mulf %160, %159 : vector<8x128xf32>
    %165 = arith.addf %163, %164 : vector<8x128xf32>
    %166 = math.tanh %165 : vector<8x128xf32>
    %167 = arith.mulf %162, %166 : vector<8x128xf32>
    %c5_i32 = arith.constant 5 : i32
    %168 = arith.index_cast %c5_i32 : i32 to index
    %c0_67 = arith.constant 0 : index
    %c0_68 = arith.constant 0 : index
    %169 = vector.load %arg0[%168, %c0_67, %c0_68] : memref<8x8x1xi32, #tpu.memory_space<vmem>>, vector<1x8x1xi32>
    %170 = vector.shape_cast %169 : vector<1x8x1xi32> to vector<8x1xi32>
    %171 = vector.broadcast %170 : vector<8x1xi32> to vector<8x128xi32>
    %172 = arith.cmpi eq, %171, %0 : vector<8x128xi32>
    %cst_69 = arith.constant 1.000000e+00 : f32
    %cst_70 = arith.constant 0.000000e+00 : f32
    %173 = vector.broadcast %cst_69 : f32 to vector<8x128xf32>
    %174 = vector.broadcast %cst_70 : f32 to vector<8x128xf32>
    %175 = arith.select %172, %173, %174 : vector<8x128xi1>, vector<8x128xf32>
    %176 = arith.truncf %175 : vector<8x128xf32> to vector<8x128xbf16>
    %c0_71 = arith.constant 0 : index
    %c0_72 = arith.constant 0 : index
    %177 = vector.load %arg3[%c0_71, %c0_72] : memref<128x512xbf16, #tpu.memory_space<vmem>>, vector<128x512xbf16>
    %cst_73 = arith.constant dense<0.000000e+00> : vector<8x512xf32>
    %178 = tpu.matmul %176, %177, %cst_73 {dimension_numbers = #tpu.dot_dimension_numbers<[1], [0], [0], [1], [0, 0, 1, 1], [], []>} : vector<8x128xbf16>, vector<128x512xbf16>, vector<8x512xf32> -> vector<8x512xf32>
    %179 = arith.truncf %167 : vector<8x128xf32> to vector<8x128xbf16>
    %c0_74 = arith.constant 0 : index
    %c0_75 = arith.constant 0 : index
    %180 = vector.load %arg4[%c0_74, %c0_75] : memref<128x512xbf16, #tpu.memory_space<vmem>>, vector<128x512xbf16>
    %cst_76 = arith.constant dense<0.000000e+00> : vector<8x512xf32>
    %181 = tpu.matmul %179, %180, %cst_76 {dimension_numbers = #tpu.dot_dimension_numbers<[1], [0], [0], [1], [0, 0, 1, 1], [], []>} : vector<8x128xbf16>, vector<128x512xbf16>, vector<8x512xf32> -> vector<8x512xf32>
    %182 = arith.addf %178, %181 : vector<8x512xf32>
    %183 = vector.extract_strided_slice %182 {offsets = [0, 0], sizes = [8, 384], strides = [1, 1]} : vector<8x512xf32> to vector<8x384xf32>
    %cst_77 = arith.constant 5.000000e-01 : f32
    %184 = vector.broadcast %cst_77 : f32 to vector<8x384xf32>
    %185 = arith.mulf %184, %183 : vector<8x384xf32>
    %186 = math.tanh %185 : vector<8x384xf32>
    %cst_78 = arith.constant 1.000000e+00 : f32
    %187 = vector.broadcast %cst_78 : f32 to vector<8x384xf32>
    %188 = arith.addf %186, %187 : vector<8x384xf32>
    %cst_79 = arith.constant 5.000000e-01 : f32
    %189 = vector.broadcast %cst_79 : f32 to vector<8x384xf32>
    %190 = arith.mulf %189, %188 : vector<8x384xf32>
    %191 = vector.extract_strided_slice %182 {offsets = [0, 384], sizes = [8, 128], strides = [1, 1]} : vector<8x512xf32> to vector<8x128xf32>
    %192 = math.tanh %191 : vector<8x128xf32>
    %193 = vector.extract_strided_slice %190 {offsets = [0, 0], sizes = [8, 128], strides = [1, 1]} : vector<8x384xf32> to vector<8x128xf32>
    %194 = vector.extract_strided_slice %190 {offsets = [0, 128], sizes = [8, 128], strides = [1, 1]} : vector<8x384xf32> to vector<8x128xf32>
    %195 = vector.extract_strided_slice %190 {offsets = [0, 256], sizes = [8, 128], strides = [1, 1]} : vector<8x384xf32> to vector<8x128xf32>
    %196 = arith.mulf %194, %165 : vector<8x128xf32>
    %197 = arith.mulf %193, %192 : vector<8x128xf32>
    %198 = arith.addf %196, %197 : vector<8x128xf32>
    %199 = math.tanh %198 : vector<8x128xf32>
    %200 = arith.mulf %195, %199 : vector<8x128xf32>
    %c6_i32 = arith.constant 6 : i32
    %201 = arith.index_cast %c6_i32 : i32 to index
    %c0_80 = arith.constant 0 : index
    %c0_81 = arith.constant 0 : index
    %202 = vector.load %arg0[%201, %c0_80, %c0_81] : memref<8x8x1xi32, #tpu.memory_space<vmem>>, vector<1x8x1xi32>
    %203 = vector.shape_cast %202 : vector<1x8x1xi32> to vector<8x1xi32>
    %204 = vector.broadcast %203 : vector<8x1xi32> to vector<8x128xi32>
    %205 = arith.cmpi eq, %204, %0 : vector<8x128xi32>
    %cst_82 = arith.constant 1.000000e+00 : f32
    %cst_83 = arith.constant 0.000000e+00 : f32
    %206 = vector.broadcast %cst_82 : f32 to vector<8x128xf32>
    %207 = vector.broadcast %cst_83 : f32 to vector<8x128xf32>
    %208 = arith.select %205, %206, %207 : vector<8x128xi1>, vector<8x128xf32>
    %209 = arith.truncf %208 : vector<8x128xf32> to vector<8x128xbf16>
    %c0_84 = arith.constant 0 : index
    %c0_85 = arith.constant 0 : index
    %210 = vector.load %arg3[%c0_84, %c0_85] : memref<128x512xbf16, #tpu.memory_space<vmem>>, vector<128x512xbf16>
    %cst_86 = arith.constant dense<0.000000e+00> : vector<8x512xf32>
    %211 = tpu.matmul %209, %210, %cst_86 {dimension_numbers = #tpu.dot_dimension_numbers<[1], [0], [0], [1], [0, 0, 1, 1], [], []>} : vector<8x128xbf16>, vector<128x512xbf16>, vector<8x512xf32> -> vector<8x512xf32>
    %212 = arith.truncf %200 : vector<8x128xf32> to vector<8x128xbf16>
    %c0_87 = arith.constant 0 : index
    %c0_88 = arith.constant 0 : index
    %213 = vector.load %arg4[%c0_87, %c0_88] : memref<128x512xbf16, #tpu.memory_space<vmem>>, vector<128x512xbf16>
    %cst_89 = arith.constant dense<0.000000e+00> : vector<8x512xf32>
    %214 = tpu.matmul %212, %213, %cst_89 {dimension_numbers = #tpu.dot_dimension_numbers<[1], [0], [0], [1], [0, 0, 1, 1], [], []>} : vector<8x128xbf16>, vector<128x512xbf16>, vector<8x512xf32> -> vector<8x512xf32>
    %215 = arith.addf %211, %214 : vector<8x512xf32>
    %216 = vector.extract_strided_slice %215 {offsets = [0, 0], sizes = [8, 384], strides = [1, 1]} : vector<8x512xf32> to vector<8x384xf32>
    %cst_90 = arith.constant 5.000000e-01 : f32
    %217 = vector.broadcast %cst_90 : f32 to vector<8x384xf32>
    %218 = arith.mulf %217, %216 : vector<8x384xf32>
    %219 = math.tanh %218 : vector<8x384xf32>
    %cst_91 = arith.constant 1.000000e+00 : f32
    %220 = vector.broadcast %cst_91 : f32 to vector<8x384xf32>
    %221 = arith.addf %219, %220 : vector<8x384xf32>
    %cst_92 = arith.constant 5.000000e-01 : f32
    %222 = vector.broadcast %cst_92 : f32 to vector<8x384xf32>
    %223 = arith.mulf %222, %221 : vector<8x384xf32>
    %224 = vector.extract_strided_slice %215 {offsets = [0, 384], sizes = [8, 128], strides = [1, 1]} : vector<8x512xf32> to vector<8x128xf32>
    %225 = math.tanh %224 : vector<8x128xf32>
    %226 = vector.extract_strided_slice %223 {offsets = [0, 0], sizes = [8, 128], strides = [1, 1]} : vector<8x384xf32> to vector<8x128xf32>
    %227 = vector.extract_strided_slice %223 {offsets = [0, 128], sizes = [8, 128], strides = [1, 1]} : vector<8x384xf32> to vector<8x128xf32>
    %228 = vector.extract_strided_slice %223 {offsets = [0, 256], sizes = [8, 128], strides = [1, 1]} : vector<8x384xf32> to vector<8x128xf32>
    %229 = arith.mulf %227, %198 : vector<8x128xf32>
    %230 = arith.mulf %226, %225 : vector<8x128xf32>
    %231 = arith.addf %229, %230 : vector<8x128xf32>
    %232 = math.tanh %231 : vector<8x128xf32>
    %233 = arith.mulf %228, %232 : vector<8x128xf32>
    %c7_i32 = arith.constant 7 : i32
    %234 = arith.index_cast %c7_i32 : i32 to index
    %c0_93 = arith.constant 0 : index
    %c0_94 = arith.constant 0 : index
    %235 = vector.load %arg0[%234, %c0_93, %c0_94] : memref<8x8x1xi32, #tpu.memory_space<vmem>>, vector<1x8x1xi32>
    %236 = vector.shape_cast %235 : vector<1x8x1xi32> to vector<8x1xi32>
    %237 = vector.broadcast %236 : vector<8x1xi32> to vector<8x128xi32>
    %238 = arith.cmpi eq, %237, %0 : vector<8x128xi32>
    %cst_95 = arith.constant 1.000000e+00 : f32
    %cst_96 = arith.constant 0.000000e+00 : f32
    %239 = vector.broadcast %cst_95 : f32 to vector<8x128xf32>
    %240 = vector.broadcast %cst_96 : f32 to vector<8x128xf32>
    %241 = arith.select %238, %239, %240 : vector<8x128xi1>, vector<8x128xf32>
    %242 = arith.truncf %241 : vector<8x128xf32> to vector<8x128xbf16>
    %c0_97 = arith.constant 0 : index
    %c0_98 = arith.constant 0 : index
    %243 = vector.load %arg3[%c0_97, %c0_98] : memref<128x512xbf16, #tpu.memory_space<vmem>>, vector<128x512xbf16>
    %cst_99 = arith.constant dense<0.000000e+00> : vector<8x512xf32>
    %244 = tpu.matmul %242, %243, %cst_99 {dimension_numbers = #tpu.dot_dimension_numbers<[1], [0], [0], [1], [0, 0, 1, 1], [], []>} : vector<8x128xbf16>, vector<128x512xbf16>, vector<8x512xf32> -> vector<8x512xf32>
    %245 = arith.truncf %233 : vector<8x128xf32> to vector<8x128xbf16>
    %c0_100 = arith.constant 0 : index
    %c0_101 = arith.constant 0 : index
    %246 = vector.load %arg4[%c0_100, %c0_101] : memref<128x512xbf16, #tpu.memory_space<vmem>>, vector<128x512xbf16>
    %cst_102 = arith.constant dense<0.000000e+00> : vector<8x512xf32>
    %247 = tpu.matmul %245, %246, %cst_102 {dimension_numbers = #tpu.dot_dimension_numbers<[1], [0], [0], [1], [0, 0, 1, 1], [], []>} : vector<8x128xbf16>, vector<128x512xbf16>, vector<8x512xf32> -> vector<8x512xf32>
    %248 = arith.addf %244, %247 : vector<8x512xf32>
    %249 = vector.extract_strided_slice %248 {offsets = [0, 0], sizes = [8, 384], strides = [1, 1]} : vector<8x512xf32> to vector<8x384xf32>
    %cst_103 = arith.constant 5.000000e-01 : f32
    %250 = vector.broadcast %cst_103 : f32 to vector<8x384xf32>
    %251 = arith.mulf %250, %249 : vector<8x384xf32>
    %252 = math.tanh %251 : vector<8x384xf32>
    %cst_104 = arith.constant 1.000000e+00 : f32
    %253 = vector.broadcast %cst_104 : f32 to vector<8x384xf32>
    %254 = arith.addf %252, %253 : vector<8x384xf32>
    %cst_105 = arith.constant 5.000000e-01 : f32
    %255 = vector.broadcast %cst_105 : f32 to vector<8x384xf32>
    %256 = arith.mulf %255, %254 : vector<8x384xf32>
    %257 = vector.extract_strided_slice %248 {offsets = [0, 384], sizes = [8, 128], strides = [1, 1]} : vector<8x512xf32> to vector<8x128xf32>
    %258 = math.tanh %257 : vector<8x128xf32>
    %259 = vector.extract_strided_slice %256 {offsets = [0, 0], sizes = [8, 128], strides = [1, 1]} : vector<8x384xf32> to vector<8x128xf32>
    %260 = vector.extract_strided_slice %256 {offsets = [0, 128], sizes = [8, 128], strides = [1, 1]} : vector<8x384xf32> to vector<8x128xf32>
    %261 = vector.extract_strided_slice %256 {offsets = [0, 256], sizes = [8, 128], strides = [1, 1]} : vector<8x384xf32> to vector<8x128xf32>
    %262 = arith.mulf %260, %231 : vector<8x128xf32>
    %263 = arith.mulf %259, %258 : vector<8x128xf32>
    %264 = arith.addf %262, %263 : vector<8x128xf32>
    %265 = math.tanh %264 : vector<8x128xf32>
    %266 = arith.mulf %261, %265 : vector<8x128xf32>
    %c8_i32 = arith.constant 8 : i32
    %c0_106 = arith.constant 0 : index
    %c0_107 = arith.constant 0 : index
    %267 = vector.load %arg8[%c0_106, %c0_107] : memref<8x128xf32, #tpu.memory_space<vmem>>, vector<8x128xf32>
    tpu.vector_store %arg8[%c0_106, %c0_107], %266 {strides = array<i32>} : memref<8x128xf32, #tpu.memory_space<vmem>>, vector<8x128xf32>,
    %c0_108 = arith.constant 0 : index
    %c0_109 = arith.constant 0 : index
    %268 = vector.load %arg9[%c0_108, %c0_109] : memref<8x128xf32, #tpu.memory_space<vmem>>, vector<8x128xf32>
    tpu.vector_store %arg9[%c0_108, %c0_109], %264 {strides = array<i32>} : memref<8x128xf32, #tpu.memory_space<vmem>>, vector<8x128xf32>,
    %269 = arith.truncf %266 : vector<8x128xf32> to vector<8x128xbf16>
    %c0_110 = arith.constant 0 : index
    %c0_111 = arith.constant 0 : index
    %270 = vector.load %arg5[%c0_110, %c0_111] : memref<128x128xbf16, #tpu.memory_space<vmem>>, vector<128x128xbf16>
    %cst_112 = arith.constant dense<0.000000e+00> : vector<8x128xf32>
    %271 = tpu.matmul %269, %270, %cst_112 {dimension_numbers = #tpu.dot_dimension_numbers<[1], [0], [0], [1], [0, 0, 1, 1], [], []>} : vector<8x128xbf16>, vector<128x128xbf16>, vector<8x128xf32> -> vector<8x128xf32>
    %c0_113 = arith.constant 0 : index
    %c0_114 = arith.constant 0 : index
    %272 = vector.load %arg6[%c0_113, %c0_114] : memref<1x128xf32, #tpu.memory_space<vmem>>, vector<1x128xf32>
    %273 = vector.broadcast %272 : vector<1x128xf32> to vector<8x128xf32>
    %274 = arith.addf %271, %273 : vector<8x128xf32>
    %c0_115 = arith.constant 0 : index
    %c0_116 = arith.constant 0 : index
    %275 = vector.load %arg7[%c0_115, %c0_116] : memref<8x128xf32, #tpu.memory_space<vmem>>, vector<8x128xf32>
    tpu.vector_store %arg7[%c0_115, %c0_116], %274 {strides = array<i32>} : memref<8x128xf32, #tpu.memory_space<vmem>>, vector<8x128xf32>,
    return
  }
}

</mosaic_0001>

<llo_original>
// kernel: tpu_custom_call.1
$region0: #{tpu_custom_call.1}
  #allocation0 [shape = 'u32[]', space=smem, size = 0x4, offset = 0x4, fixed_abs, tag = 'smem constant byte address 0x4 - core index']
  #allocation1 [shape = 'u32[144,128]{1,0:T(1,128)}', space=vmem, size = 0x12000, scoped, tag = 'internal scratch']
  %s0 = inlined_call_operand.vmem [shape: s32[8,8,1], index: 0, kind: input, shape index: {}]
  %s1 = inlined_call_operand.vmem [shape: f32[8,128], index: 1, kind: input, shape index: {}]
  %s2 = inlined_call_operand.vmem [shape: f32[8,128], index: 2, kind: input, shape index: {}]
  %s3 = inlined_call_operand.hbm [shape: bf16[128,512], index: 3, kind: input, shape index: {}]
  %s4 = inlined_call_operand.hbm [shape: bf16[128,512], index: 4, kind: input, shape index: {}]
  %s5 = inlined_call_operand.vmem [shape: bf16[128,128], index: 5, kind: input, shape index: {}]
  %s6 = inlined_call_operand.vmem [shape: f32[1,128], index: 6, kind: input, shape index: {}]
  %s7 = inlined_call_operand.hbm [shape: f32[8,128], index: 7, kind: output, shape index: {0}]
  %s8 = inlined_call_operand.hbm [shape: f32[8,128], index: 8, kind: output, shape index: {1}]
  %s9 = inlined_call_operand.hbm [shape: f32[8,128], index: 9, kind: output, shape index: {2}]
  %10 = xla_tuple %s7, %s8, %s9
  %s11 = sld [smem:[#allocation0]]
  $region62: #{tpu_custom_call.1} parent=0
    _
  %s13 = ssub.s32 1, %s11
  %s14 = scalar_select 0, %s13, %s11
  $region1: #{tpu_custom_call.1} parent=0
    #allocation2 [shape = 'u8[131072]{0}', space=vmem, size = 0x20000, scoped, tag = 'input window, operand 3, single buffered']
    #allocation3 [shape = 's32[1]{0}', space=sflag, size = 0x4, scoped, tag = 'scoped memory for tpu_custom_call.1']
    #allocation4 [shape = 's32[1]{0}', space=sflag, size = 0x4, scoped, tag = 'scoped memory for tpu_custom_call.1']
    #allocation5 [shape = 'u8[131072]{0}', space=vmem, size = 0x20000, scoped, tag = 'input window, operand 4, single buffered']
    #allocation6 [shape = 's32[1]{0}', space=sflag, size = 0x4, scoped, tag = 'scoped memory for tpu_custom_call.1']
    #allocation7 [shape = 'u8[4096]{0}', space=vmem, size = 0x1000, scoped, tag = 'output window, operand 0, single buffered']
    #allocation8 [shape = 'u8[4096]{0}', space=vmem, size = 0x1000, scoped, tag = 'output window, operand 1, single buffered']
    #allocation9 [shape = 's32[1]{0}', space=sflag, size = 0x4, scoped, tag = 'scoped memory for tpu_custom_call.1']
    #allocation10 [shape = 'u8[4096]{0}', space=vmem, size = 0x1000, scoped, tag = 'output window, operand 2, single buffered']
    %15 = vsyncpa [#allocation3], 0
    %16 = vsyncpa [#allocation6], 0
    %17 = vsyncpa [#allocation4], 0
    %18 = vsyncpa [#allocation9], 0
    // Predicated region
    $region2: #{tpu_custom_call.1} parent=1 // pred_check
      _
    $region3: #{tpu_custom_call.1} parent=1 // pred_check_branch
      %20 = sbr.rel (0) target = $region5
    $region4: #{tpu_custom_call.1} parent=1 // pred_region
      _
    $region5: #{tpu_custom_call.1} parent=1 // pred_fallthru
      _
    // Predicated region
    $region6: #{tpu_custom_call.1} parent=1 // pred_check
      _
    $region7: #{tpu_custom_call.1} parent=1 // pred_check_branch
      %22 = sbr.rel (0) target = $region9
    $region8: #{tpu_custom_call.1} parent=1 // pred_region
      _
    $region9: #{tpu_custom_call.1} parent=1 // pred_fallthru
      _
    // Predicated region
    $region10: #{tpu_custom_call.1} parent=1 // pred_check
      _
    $region11: #{tpu_custom_call.1} parent=1 // pred_check_branch
      %24 = sbr.rel (0) target = $region13
    $region12: #{tpu_custom_call.1} parent=1 // pred_region
      _
    $region13: #{tpu_custom_call.1} parent=1 // pred_fallthru
      _
    // Predicated region
    $region14: #{tpu_custom_call.1} parent=1 // pred_check
      _
    $region15: #{tpu_custom_call.1} parent=1 // pred_check_branch
      %26 = sbr.rel (0) target = $region17
    $region16: #{tpu_custom_call.1} parent=1 // pred_region
      %s28 = ssub.s32 4096, 4096
      %29 = vsyncadd [#allocation3], %s28
      %s30 = sshll.u32 [#allocation2], 4
      %s31 = int_to_ptr.vmem [resolvable:$true] %s30
      %36 = dma.hbm_to_vmem [thread:$0]  %s3, 4096, %s31, [#allocation3], 256, 256, 16
    $region17: #{tpu_custom_call.1} parent=1 // pred_fallthru
      _
    // Predicated region
    $region18: #{tpu_custom_call.1} parent=1 // pred_check
      _
    $region19: #{tpu_custom_call.1} parent=1 // pred_check_branch
      %38 = sbr.rel (0) target = $region21
    $region20: #{tpu_custom_call.1} parent=1 // pred_region
      %s40 = ssub.s32 4096, 4096
      %41 = vsyncadd [#allocation6], %s40
      %s42 = sshll.u32 [#allocation5], 4
      %s43 = int_to_ptr.vmem [resolvable:$true] %s42
      %48 = dma.hbm_to_vmem [thread:$0]  %s4, 4096, %s43, [#allocation6], 256, 256, 16
    $region21: #{tpu_custom_call.1} parent=1 // pred_fallthru
      _
    // Predicated region
    $region22: #{tpu_custom_call.1} parent=1 // pred_check
      _
    $region23: #{tpu_custom_call.1} parent=1 // pred_check_branch
      %50 = sbr.rel (0) target = $region25
    $region24: #{tpu_custom_call.1} parent=1 // pred_region
      _
    $region25: #{tpu_custom_call.1} parent=1 // pred_fallthru
      _
    // Predicated region
    $region26: #{tpu_custom_call.1} parent=1 // pred_check
      _
    $region27: #{tpu_custom_call.1} parent=1 // pred_check_branch
      %52 = sbr.rel (0) target = $region29
    $region28: #{tpu_custom_call.1} parent=1 // pred_region
      _
    $region29: #{tpu_custom_call.1} parent=1 // pred_fallthru
      _
    // Predicated region
    $region30: #{tpu_custom_call.1} parent=1 // pred_check
      _
    $region31: #{tpu_custom_call.1} parent=1 // pred_check_branch
      %54 = sbr.rel (0) target = $region33
    $region32: #{tpu_custom_call.1} parent=1 // pred_region
      %55 = dma.done [#allocation3], 4096
    $region33: #{tpu_custom_call.1} parent=1 // pred_fallthru
      _
    // Predicated region
    $region34: #{tpu_custom_call.1} parent=1 // pred_check
      _
    $region35: #{tpu_custom_call.1} parent=1 // pred_check_branch
      %57 = sbr.rel (0) target = $region37
    $region36: #{tpu_custom_call.1} parent=1 // pred_region
      %58 = dma.done [#allocation6], 4096
    $region37: #{tpu_custom_call.1} parent=1 // pred_fallthru
      _
    %v60 = vlaneseq
    %v61 = vand.u32 %v60, 127
    %v62 = vld [vmem:[%s1] sm:$0xff]
    %v63 = vld [vmem:[%s2] sm:$0xff]
    %v64 = vld [vmem:[%s0] sm:$0xff]
    %65 = vset.pattern.permute.xlu0 0
    %66 = vperm.xlu0 %65, %v64
    %v67 = vpop.permute.xlu0 %66
    %vm68 = vcmp.eq.s32.totalorder %v67, %v61
    %v69 = vsel %vm68, 1.0, 0.0
    %v70 = vpack.c.bf16 %v69, %v69
    %v71 = vld [vmem:[#allocation2] sm:$0xff]
    %v72 = vld [vmem:[#allocation2 + $0x8] sm:$0xff]
    %v73 = vld [vmem:[#allocation2 + $0x10] sm:$0xff]
    %v74 = vld [vmem:[#allocation2 + $0x18] sm:$0xff]
    %v75 = vld [vmem:[#allocation2 + $0x20] sm:$0xff]
    %v76 = vld [vmem:[#allocation2 + $0x28] sm:$0xff]
    %v77 = vld [vmem:[#allocation2 + $0x30] sm:$0xff]
    %v78 = vld [vmem:[#allocation2 + $0x38] sm:$0xff]
    %v79 = vld [vmem:[#allocation2 + $0x40] sm:$0xff]
    %v80 = vld [vmem:[#allocation2 + $0x48] sm:$0xff]
    %v81 = vld [vmem:[#allocation2 + $0x50] sm:$0xff]
    %v82 = vld [vmem:[#allocation2 + $0x58] sm:$0xff]
    %v83 = vld [vmem:[#allocation2 + $0x60] sm:$0xff]
    %v84 = vld [vmem:[#allocation2 + $0x68] sm:$0xff]
    %v85 = vld [vmem:[#allocation2 + $0x70] sm:$0xff]
    %v86 = vld [vmem:[#allocation2 + $0x78] sm:$0xff]
    %v87 = vld [vmem:[#allocation2 + $0x80] sm:$0xff]
    %v88 = vld [vmem:[#allocation2 + $0x88] sm:$0xff]
    %v89 = vld [vmem:[#allocation2 + $0x90] sm:$0xff]
    %v90 = vld [vmem:[#allocation2 + $0x98] sm:$0xff]
    %v91 = vld [vmem:[#allocation2 + $0xa0] sm:$0xff]
    %v92 = vld [vmem:[#allocation2 + $0xa8] sm:$0xff]
    %v93 = vld [vmem:[#allocation2 + $0xb0] sm:$0xff]
    %v94 = vld [vmem:[#allocation2 + $0xb8] sm:$0xff]
    %v95 = vld [vmem:[#allocation2 + $0xc0] sm:$0xff]
    %v96 = vld [vmem:[#allocation2 + $0xc8] sm:$0xff]
    %v97 = vld [vmem:[#allocation2 + $0xd0] sm:$0xff]
    %v98 = vld [vmem:[#allocation2 + $0xd8] sm:$0xff]
    %v99 = vld [vmem:[#allocation2 + $0xe0] sm:$0xff]
    %v100 = vld [vmem:[#allocation2 + $0xe8] sm:$0xff]
    %v101 = vld [vmem:[#allocation2 + $0xf0] sm:$0xff]
    %v102 = vld [vmem:[#allocation2 + $0xf8] sm:$0xff]
    %v103 = vpack.c.bf16 %v62, %v62
    %v104 = vld [vmem:[#allocation5] sm:$0xff]
    %v105 = vld [vmem:[#allocation5 + $0x8] sm:$0xff]
    %v106 = vld [vmem:[#allocation5 + $0x10] sm:$0xff]
    %v107 = vld [vmem:[#allocation5 + $0x18] sm:$0xff]
    %v108 = vld [vmem:[#allocation5 + $0x20] sm:$0xff]
    %v109 = vld [vmem:[#allocation5 + $0x28] sm:$0xff]
    %v110 = vld [vmem:[#allocation5 + $0x30] sm:$0xff]
    %v111 = vld [vmem:[#allocation5 + $0x38] sm:$0xff]
    %v112 = vld [vmem:[#allocation5 + $0x40] sm:$0xff]
    %v113 = vld [vmem:[#allocation5 + $0x48] sm:$0xff]
    %v114 = vld [vmem:[#allocation5 + $0x50] sm:$0xff]
    %v115 = vld [vmem:[#allocation5 + $0x58] sm:$0xff]
    %v116 = vld [vmem:[#allocation5 + $0x60] sm:$0xff]
    %v117 = vld [vmem:[#allocation5 + $0x68] sm:$0xff]
    %v118 = vld [vmem:[#allocation5 + $0x70] sm:$0xff]
    %v119 = vld [vmem:[#allocation5 + $0x78] sm:$0xff]
    %v120 = vld [vmem:[#allocation5 + $0x80] sm:$0xff]
    %v121 = vld [vmem:[#allocation5 + $0x88] sm:$0xff]
    %v122 = vld [vmem:[#allocation5 + $0x90] sm:$0xff]
    %v123 = vld [vmem:[#allocation5 + $0x98] sm:$0xff]
    %v124 = vld [vmem:[#allocation5 + $0xa0] sm:$0xff]
    %v125 = vld [vmem:[#allocation5 + $0xa8] sm:$0xff]
    %v126 = vld [vmem:[#allocation5 + $0xb0] sm:$0xff]
    %v127 = vld [vmem:[#allocation5 + $0xb8] sm:$0xff]
    %v128 = vld [vmem:[#allocation5 + $0xc0] sm:$0xff]
    %v129 = vld [vmem:[#allocation5 + $0xc8] sm:$0xff]
    %v130 = vld [vmem:[#allocation5 + $0xd0] sm:$0xff]
    %v131 = vld [vmem:[#allocation5 + $0xd8] sm:$0xff]
    %v132 = vld [vmem:[#allocation5 + $0xe0] sm:$0xff]
    %v133 = vld [vmem:[#allocation5 + $0xe8] sm:$0xff]
    %v134 = vld [vmem:[#allocation5 + $0xf0] sm:$0xff]
    %v135 = vld [vmem:[#allocation5 + $0xf8] sm:$0xff]
    %v168 = vunpack.c.l.b16 %v104
    %v169 = vunpack.c.h.b16 %v104
    %v170 = vunpack.c.l.b16 %v105
    %v171 = vunpack.c.h.b16 %v105
    %v172 = vunpack.c.l.b16 %v106
    %v173 = vunpack.c.h.b16 %v106
    %v174 = vunpack.c.l.b16 %v107
    %v175 = vunpack.c.h.b16 %v107
    %v176 = vunpack.c.l.b16 %v108
    %v177 = vunpack.c.h.b16 %v108
    %v178 = vunpack.c.l.b16 %v109
    %v179 = vunpack.c.h.b16 %v109
    %v180 = vunpack.c.l.b16 %v110
    %v181 = vunpack.c.h.b16 %v110
    %v182 = vunpack.c.l.b16 %v111
    %v183 = vunpack.c.h.b16 %v111
    %v184 = vunpack.c.l.b16 %v112
    %v185 = vunpack.c.h.b16 %v112
    %v186 = vunpack.c.l.b16 %v113
    %v187 = vunpack.c.h.b16 %v113
    %v188 = vunpack.c.l.b16 %v114
    %v189 = vunpack.c.h.b16 %v114
    %v190 = vunpack.c.l.b16 %v115
    %v191 = vunpack.c.h.b16 %v115
    %v192 = vunpack.c.l.b16 %v116
    %v193 = vunpack.c.h.b16 %v116
    %v194 = vunpack.c.l.b16 %v117
    %v195 = vunpack.c.h.b16 %v117
    %v196 = vunpack.c.l.b16 %v118
    %v197 = vunpack.c.h.b16 %v118
    %v198 = vunpack.c.l.b16 %v119
    %v199 = vunpack.c.h.b16 %v119
    %v200 = vunpack.c.l.b16 %v120
    %v201 = vunpack.c.h.b16 %v120
    %v202 = vunpack.c.l.b16 %v121
    %v203 = vunpack.c.h.b16 %v121
    %v204 = vunpack.c.l.b16 %v122
    %v205 = vunpack.c.h.b16 %v122
    %v206 = vunpack.c.l.b16 %v123
    %v207 = vunpack.c.h.b16 %v123
    %v208 = vunpack.c.l.b16 %v124
    %v209 = vunpack.c.h.b16 %v124
    %v210 = vunpack.c.l.b16 %v125
    %v211 = vunpack.c.h.b16 %v125
    %v212 = vunpack.c.l.b16 %v126
    %v213 = vunpack.c.h.b16 %v126
    %v214 = vunpack.c.l.b16 %v127
    %v215 = vunpack.c.h.b16 %v127
    %v216 = vunpack.c.l.b16 %v128
    %v217 = vunpack.c.h.b16 %v128
    %v218 = vunpack.c.l.b16 %v129
    %v219 = vunpack.c.h.b16 %v129
    %v220 = vunpack.c.l.b16 %v130
    %v221 = vunpack.c.h.b16 %v130
    %v222 = vunpack.c.l.b16 %v131
    %v223 = vunpack.c.h.b16 %v131
    %v224 = vunpack.c.l.b16 %v132
    %v225 = vunpack.c.h.b16 %v132
    %v226 = vunpack.c.l.b16 %v133
    %v227 = vunpack.c.h.b16 %v133
    %v228 = vunpack.c.l.b16 %v134
    %v229 = vunpack.c.h.b16 %v134
    %v230 = vunpack.c.l.b16 %v135
    %v231 = vunpack.c.h.b16 %v135
    %v232 = vpack.c.b16 %v172, %v168
    %v233 = vpack.c.b16 %v173, %v169
    %v234 = vpack.c.b16 %v174, %v170
    %v235 = vpack.c.b16 %v175, %v171
    %v236 = vpack.c.b16 %v180, %v176
    %v237 = vpack.c.b16 %v181, %v177
    %v238 = vpack.c.b16 %v182, %v178
    %v239 = vpack.c.b16 %v183, %v179
    %v240 = vpack.c.b16 %v188, %v184
    %v241 = vpack.c.b16 %v189, %v185
    %v242 = vpack.c.b16 %v190, %v186
    %v243 = vpack.c.b16 %v191, %v187
    %v244 = vpack.c.b16 %v196, %v192
    %v245 = vpack.c.b16 %v197, %v193
    %v246 = vpack.c.b16 %v198, %v194
    %v247 = vpack.c.b16 %v199, %v195
    %v248 = vpack.c.b16 %v204, %v200
    %v249 = vpack.c.b16 %v205, %v201
    %v250 = vpack.c.b16 %v206, %v202
    %v251 = vpack.c.b16 %v207, %v203
    %v252 = vpack.c.b16 %v212, %v208
    %v253 = vpack.c.b16 %v213, %v209
    %v254 = vpack.c.b16 %v214, %v210
    %v255 = vpack.c.b16 %v215, %v211
    %v256 = vpack.c.b16 %v220, %v216
    %v257 = vpack.c.b16 %v221, %v217
    %v258 = vpack.c.b16 %v222, %v218
    %v259 = vpack.c.b16 %v223, %v219
    %v260 = vpack.c.b16 %v228, %v224
    %v261 = vpack.c.b16 %v229, %v225
    %v262 = vpack.c.b16 %v230, %v226
    %v263 = vpack.c.b16 %v231, %v227
    %296 = vmatprep.subr.bf16.mxu0 %v233
    %297 = vmatpush1.bf16.msra.mxu0 %v232
    %298 = vmatprep.subr.bf16.mxu0 %v237
    %299 = vmatpush1.bf16.msra.mxu0 %v236
    %300 = vmatprep.subr.bf16.mxu0 %v241
    %301 = vmatpush1.bf16.msra.mxu0 %v240
    %302 = vmatprep.subr.bf16.mxu0 %v245
    %303 = vmatpush1.bf16.msra.mxu0 %v244
    %304 = vmatprep.subr.bf16.mxu0 %v249
    %305 = vmatpush1.bf16.msra.mxu0 %v248
    %306 = vmatprep.subr.bf16.mxu0 %v253
    %307 = vmatpush1.bf16.msra.mxu0 %v252
    %308 = vmatprep.subr.bf16.mxu0 %v257
    %309 = vmatpush1.bf16.msra.mxu0 %v256
    %310 = vmatprep.subr.bf16.mxu0 %v261
    %311 = vmatpush1.bf16.msra.mxu0 %v260
    %312 = vmatprep.subr.bf16.mxu0 0
    %313 = vmatpush1.bf16.msra.mxu0 0
    %314 = vmatprep.subr.bf16.mxu0 0
    %315 = vmatpush1.bf16.msra.mxu0 0
    %316 = vmatprep.subr.bf16.mxu0 0
    %317 = vmatpush1.bf16.msra.mxu0 0
    %318 = vmatprep.subr.bf16.mxu0 0
    %319 = vmatpush1.bf16.msra.mxu0 0
    %320 = vmatprep.subr.bf16.mxu0 0
    %321 = vmatpush1.bf16.msra.mxu0 0
    %322 = vmatprep.subr.bf16.mxu0 0
    %323 = vmatpush1.bf16.msra.mxu0 0
    %324 = vmatprep.subr.bf16.mxu0 0
    %325 = vmatpush1.bf16.msra.mxu0 0
    %326 = vmatprep.subr.bf16.mxu0 0
    %327 = vmatpush1.bf16.msra.mxu0 0
    %328 = vmatprep.mubr.bf16.mxu0 0
    %329 = vmatmul.mubr.bf16.gmra.mrb[0].mxu0 %v103
    %v330 = vpop.f32.mrb[0].mxu0
    %v331 = vadd.f32 0.0, %v330
    %v332 = vpop.f32.mrb[0].mxu0
    %v333 = vadd.f32 0.0, %v332
    %v334 = vpop.f32.mrb[0].mxu0
    %v335 = vpop.f32.mrb[0].mxu0
    %336 = vdwg.mxu0
    %337 = vmatprep.subr.bf16.mxu0 %v235
    %338 = vmatpush1.bf16.msra.mxu0 %v234
    %339 = vmatprep.subr.bf16.mxu0 %v239
    %340 = vmatpush1.bf16.msra.mxu0 %v238
    %341 = vmatprep.subr.bf16.mxu0 %v243
    %342 = vmatpush1.bf16.msra.mxu0 %v242
    %343 = vmatprep.subr.bf16.mxu0 %v247
    %344 = vmatpush1.bf16.msra.mxu0 %v246
    %345 = vmatprep.subr.bf16.mxu0 %v251
    %346 = vmatpush1.bf16.msra.mxu0 %v250
    %347 = vmatprep.subr.bf16.mxu0 %v255
    %348 = vmatpush1.bf16.msra.mxu0 %v254
    %349 = vmatprep.subr.bf16.mxu0 %v259
    %350 = vmatpush1.bf16.msra.mxu0 %v258
    %351 = vmatprep.subr.bf16.mxu0 %v263
    %352 = vmatpush1.bf16.msra.mxu0 %v262
    %353 = vmatprep.subr.bf16.mxu0 0
    %354 = vmatpush1.bf16.msra.mxu0 0
    %355 = vmatprep.subr.bf16.mxu0 0
    %356 = vmatpush1.bf16.msra.mxu0 0
    %357 = vmatprep.subr.bf16.mxu0 0
    %358 = vmatpush1.bf16.msra.mxu0 0
    %359 = vmatprep.subr.bf16.mxu0 0
    %360 = vmatpush1.bf16.msra.mxu0 0
    %361 = vmatprep.subr.bf16.mxu0 0
    %362 = vmatpush1.bf16.msra.mxu0 0
    %363 = vmatprep.subr.bf16.mxu0 0
    %364 = vmatpush1.bf16.msra.mxu0 0
    %365 = vmatprep.subr.bf16.mxu0 0
    %366 = vmatpush1.bf16.msra.mxu0 0
    %367 = vmatprep.subr.bf16.mxu0 0
    %368 = vmatpush1.bf16.msra.mxu0 0
    %369 = vmatprep.mubr.bf16.mxu0 0
    %370 = vmatmul.mubr.bf16.gmra.mrb[0].mxu0 %v103
    %v371 = vpop.f32.mrb[0].mxu0
    %v372 = vadd.f32 0.0, %v371
    %v373 = vpop.f32.mrb[0].mxu0
    %v374 = vadd.f32 0.0, %v373
    %v375 = vpop.f32.mrb[0].mxu0
    %v376 = vpop.f32.mrb[0].mxu0
    %377 = vdwg.mxu0
    %v410 = vunpack.c.l.b16 %v71
    %v411 = vunpack.c.h.b16 %v71
    %v412 = vunpack.c.l.b16 %v72
    %v413 = vunpack.c.h.b16 %v72
    %v414 = vunpack.c.l.b16 %v73
    %v415 = vunpack.c.h.b16 %v73
    %v416 = vunpack.c.l.b16 %v74
    %v417 = vunpack.c.h.b16 %v74
    %v418 = vunpack.c.l.b16 %v75
    %v419 = vunpack.c.h.b16 %v75
    %v420 = vunpack.c.l.b16 %v76
    %v421 = vunpack.c.h.b16 %v76
    %v422 = vunpack.c.l.b16 %v77
    %v423 = vunpack.c.h.b16 %v77
    %v424 = vunpack.c.l.b16 %v78
    %v425 = vunpack.c.h.b16 %v78
    %v426 = vunpack.c.l.b16 %v79
    %v427 = vunpack.c.h.b16 %v79
    %v428 = vunpack.c.l.b16 %v80
    %v429 = vunpack.c.h.b16 %v80
    %v430 = vunpack.c.l.b16 %v81
    %v431 = vunpack.c.h.b16 %v81
    %v432 = vunpack.c.l.b16 %v82
    %v433 = vunpack.c.h.b16 %v82
    %v434 = vunpack.c.l.b16 %v83
    %v435 = vunpack.c.h.b16 %v83
    %v436 = vunpack.c.l.b16 %v84
    %v437 = vunpack.c.h.b16 %v84
    %v438 = vunpack.c.l.b16 %v85
    %v439 = vunpack.c.h.b16 %v85
    %v440 = vunpack.c.l.b16 %v86
    %v441 = vunpack.c.h.b16 %v86
    %v442 = vunpack.c.l.b16 %v87
    %v443 = vunpack.c.h.b16 %v87
    %v444 = vunpack.c.l.b16 %v88
    %v445 = vunpack.c.h.b16 %v88
    %v446 = vunpack.c.l.b16 %v89
    %v447 = vunpack.c.h.b16 %v89
    %v448 = vunpack.c.l.b16 %v90
    %v449 = vunpack.c.h.b16 %v90
    %v450 = vunpack.c.l.b16 %v91
    %v451 = vunpack.c.h.b16 %v91
    %v452 = vunpack.c.l.b16 %v92
    %v453 = vunpack.c.h.b16 %v92
    %v454 = vunpack.c.l.b16 %v93
    %v455 = vunpack.c.h.b16 %v93
    %v456 = vunpack.c.l.b16 %v94
    %v457 = vunpack.c.h.b16 %v94
    %v458 = vunpack.c.l.b16 %v95
    %v459 = vunpack.c.h.b16 %v95
    %v460 = vunpack.c.l.b16 %v96
    %v461 = vunpack.c.h.b16 %v96
    %v462 = vunpack.c.l.b16 %v97
    %v463 = vunpack.c.h.b16 %v97
    %v464 = vunpack.c.l.b16 %v98
    %v465 = vunpack.c.h.b16 %v98
    %v466 = vunpack.c.l.b16 %v99
    %v467 = vunpack.c.h.b16 %v99
    %v468 = vunpack.c.l.b16 %v100
    %v469 = vunpack.c.h.b16 %v100
    %v470 = vunpack.c.l.b16 %v101
    %v471 = vunpack.c.h.b16 %v101
    %v472 = vunpack.c.l.b16 %v102
    %v473 = vunpack.c.h.b16 %v102
    %v474 = vpack.c.b16 %v414, %v410
    %v475 = vpack.c.b16 %v415, %v411
    %v476 = vpack.c.b16 %v416, %v412
    %v477 = vpack.c.b16 %v417, %v413
    %v478 = vpack.c.b16 %v422, %v418
    %v479 = vpack.c.b16 %v423, %v419
    %v480 = vpack.c.b16 %v424, %v420
    %v481 = vpack.c.b16 %v425, %v421
    %v482 = vpack.c.b16 %v430, %v426
    %v483 = vpack.c.b16 %v431, %v427
    %v484 = vpack.c.b16 %v432, %v428
    %v485 = vpack.c.b16 %v433, %v429
    %v486 = vpack.c.b16 %v438, %v434
    %v487 = vpack.c.b16 %v439, %v435
    %v488 = vpack.c.b16 %v440, %v436
    %v489 = vpack.c.b16 %v441, %v437
    %v490 = vpack.c.b16 %v446, %v442
    %v491 = vpack.c.b16 %v447, %v443
    %v492 = vpack.c.b16 %v448, %v444
    %v493 = vpack.c.b16 %v449, %v445
    %v494 = vpack.c.b16 %v454, %v450
    %v495 = vpack.c.b16 %v455, %v451
    %v496 = vpack.c.b16 %v456, %v452
    %v497 = vpack.c.b16 %v457, %v453
    %v498 = vpack.c.b16 %v462, %v458
    %v499 = vpack.c.b16 %v463, %v459
    %v500 = vpack.c.b16 %v464, %v460
    %v501 = vpack.c.b16 %v465, %v461
    %v502 = vpack.c.b16 %v470, %v466
    %v503 = vpack.c.b16 %v471, %v467
    %v504 = vpack.c.b16 %v472, %v468
    %v505 = vpack.c.b16 %v473, %v469
    %538 = vmatprep.subr.bf16.mxu0 %v475
    %539 = vmatpush1.bf16.msra.mxu0 %v474
    %540 = vmatprep.subr.bf16.mxu0 %v479
    %541 = vmatpush1.bf16.msra.mxu0 %v478
    %542 = vmatprep.subr.bf16.mxu0 %v483
    %543 = vmatpush1.bf16.msra.mxu0 %v482
    %544 = vmatprep.subr.bf16.mxu0 %v487
    %545 = vmatpush1.bf16.msra.mxu0 %v486
    %546 = vmatprep.subr.bf16.mxu0 %v491
    %547 = vmatpush1.bf16.msra.mxu0 %v490
    %548 = vmatprep.subr.bf16.mxu0 %v495
    %549 = vmatpush1.bf16.msra.mxu0 %v494
    %550 = vmatprep.subr.bf16.mxu0 %v499
    %551 = vmatpush1.bf16.msra.mxu0 %v498
    %552 = vmatprep.subr.bf16.mxu0 %v503
    %553 = vmatpush1.bf16.msra.mxu0 %v502
    %554 = vmatprep.subr.bf16.mxu0 0
    %555 = vmatpush1.bf16.msra.mxu0 0
    %556 = vmatprep.subr.bf16.mxu0 0
    %557 = vmatpush1.bf16.msra.mxu0 0
    %558 = vmatprep.subr.bf16.mxu0 0
    %559 = vmatpush1.bf16.msra.mxu0 0
    %560 = vmatprep.subr.bf16.mxu0 0
    %561 = vmatpush1.bf16.msra.mxu0 0
    %562 = vmatprep.subr.bf16.mxu0 0
    %563 = vmatpush1.bf16.msra.mxu0 0
    %564 = vmatprep.subr.bf16.mxu0 0
    %565 = vmatpush1.bf16.msra.mxu0 0
    %566 = vmatprep.subr.bf16.mxu0 0
    %567 = vmatpush1.bf16.msra.mxu0 0
    %568 = vmatprep.subr.bf16.mxu0 0
    %569 = vmatpush1.bf16.msra.mxu0 0
    %570 = vmatprep.mubr.bf16.mxu0 0
    %571 = vmatmul.mubr.bf16.gmra.mrb[0].mxu0 %v70
    %v572 = vpop.f32.mrb[0].mxu0
    %v573 = vadd.f32 %v331, %v572
    %v574 = vpop.f32.mrb[0].mxu0
    %v575 = vadd.f32 %v333, %v574
    %v576 = vpop.f32.mrb[0].mxu0
    %v577 = vpop.f32.mrb[0].mxu0
    %578 = vdwg.mxu0
    %579 = vmatprep.subr.bf16.mxu0 %v477
    %580 = vmatpush1.bf16.msra.mxu0 %v476
    %581 = vmatprep.subr.bf16.mxu0 %v481
    %582 = vmatpush1.bf16.msra.mxu0 %v480
    %583 = vmatprep.subr.bf16.mxu0 %v485
    %584 = vmatpush1.bf16.msra.mxu0 %v484
    %585 = vmatprep.subr.bf16.mxu0 %v489
    %586 = vmatpush1.bf16.msra.mxu0 %v488
    %587 = vmatprep.subr.bf16.mxu0 %v493
    %588 = vmatpush1.bf16.msra.mxu0 %v492
    %589 = vmatprep.subr.bf16.mxu0 %v497
    %590 = vmatpush1.bf16.msra.mxu0 %v496
    %591 = vmatprep.subr.bf16.mxu0 %v501
    %592 = vmatpush1.bf16.msra.mxu0 %v500
    %593 = vmatprep.subr.bf16.mxu0 %v505
    %594 = vmatpush1.bf16.msra.mxu0 %v504
    %595 = vmatprep.subr.bf16.mxu0 0
    %596 = vmatpush1.bf16.msra.mxu0 0
    %597 = vmatprep.subr.bf16.mxu0 0
    %598 = vmatpush1.bf16.msra.mxu0 0
    %599 = vmatprep.subr.bf16.mxu0 0
    %600 = vmatpush1.bf16.msra.mxu0 0
    %601 = vmatprep.subr.bf16.mxu0 0
    %602 = vmatpush1.bf16.msra.mxu0 0
    %603 = vmatprep.subr.bf16.mxu0 0
    %604 = vmatpush1.bf16.msra.mxu0 0
    %605 = vmatprep.subr.bf16.mxu0 0
    %606 = vmatpush1.bf16.msra.mxu0 0
    %607 = vmatprep.subr.bf16.mxu0 0
    %608 = vmatpush1.bf16.msra.mxu0 0
    %609 = vmatprep.subr.bf16.mxu0 0
    %610 = vmatpush1.bf16.msra.mxu0 0
    %611 = vmatprep.mubr.bf16.mxu0 0
    %612 = vmatmul.mubr.bf16.gmra.mrb[0].mxu0 %v70
    %v613 = vpop.f32.mrb[0].mxu0
    %v614 = vadd.f32 %v372, %v613
    %v615 = vpop.f32.mrb[0].mxu0
    %v616 = vadd.f32 %v374, %v615
    %v617 = vpop.f32.mrb[0].mxu0
    %v618 = vpop.f32.mrb[0].mxu0
    %619 = vdwg.mxu0
    %v620 = vmul.f32 %v573, 0.5
    %v621 = vmul.f32 %v575, 0.5
    %v622 = vmul.f32 %v614, 0.5
    %v623 = vtanh.pop %v620
    %v624 = vtanh.pop %v621
    %v625 = vtanh.pop %v622
    %v626 = vadd.f32 %v623, 1.0
    %v627 = vadd.f32 %v624, 1.0
    %v628 = vadd.f32 %v625, 1.0
    %v629 = vmul.f32 %v626, 0.5
    %v630 = vmul.f32 %v627, 0.5
    %v631 = vmul.f32 %v628, 0.5
    %v632 = vtanh.pop %v616
    %v633 = vmul.f32 %v630, %v63
    %v634 = vmul.f32 %v629, %v632
    %v635 = vadd.f32 %v633, %v634
    %v636 = vtanh.pop %v635
    %v637 = vmul.f32 %v631, %v636
    %s638 = scalar_lea.vmem %s0, 8
    %v639 = vld [vmem:[%s638] sm:$0xff]
    %640 = vset.pattern.permute.xlu0 0
    %641 = vperm.xlu0 %640, %v639
    %v642 = vpop.permute.xlu0 %641
    %vm643 = vcmp.eq.s32.totalorder %v642, %v61
    %v644 = vsel %vm643, 1.0, 0.0
    %v645 = vpack.c.bf16 %v644, %v644
    %v646 = vpack.c.bf16 %v637, %v637
    %647 = vmatprep.subr.bf16.mxu0 %v233
    %648 = vmatpush1.bf16.msra.mxu0 %v232
    %649 = vmatprep.subr.bf16.mxu0 %v237
    %650 = vmatpush1.bf16.msra.mxu0 %v236
    %651 = vmatprep.subr.bf16.mxu0 %v241
    %652 = vmatpush1.bf16.msra.mxu0 %v240
    %653 = vmatprep.subr.bf16.mxu0 %v245
    %654 = vmatpush1.bf16.msra.mxu0 %v244
    %655 = vmatprep.subr.bf16.mxu0 %v249
    %656 = vmatpush1.bf16.msra.mxu0 %v248
    %657 = vmatprep.subr.bf16.mxu0 %v253
    %658 = vmatpush1.bf16.msra.mxu0 %v252
    %659 = vmatprep.subr.bf16.mxu0 %v257
    %660 = vmatpush1.bf16.msra.mxu0 %v256
    %661 = vmatprep.subr.bf16.mxu0 %v261
    %662 = vmatpush1.bf16.msra.mxu0 %v260
    %663 = vmatprep.subr.bf16.mxu0 0
    %664 = vmatpush1.bf16.msra.mxu0 0
    %665 = vmatprep.subr.bf16.mxu0 0
    %666 = vmatpush1.bf16.msra.mxu0 0
    %667 = vmatprep.subr.bf16.mxu0 0
    %668 = vmatpush1.bf16.msra.mxu0 0
    %669 = vmatprep.subr.bf16.mxu0 0
    %670 = vmatpush1.bf16.msra.mxu0 0
    %671 = vmatprep.subr.bf16.mxu0 0
    %672 = vmatpush1.bf16.msra.mxu0 0
    %673 = vmatprep.subr.bf16.mxu0 0
    %674 = vmatpush1.bf16.msra.mxu0 0
    %675 = vmatprep.subr.bf16.mxu0 0
    %676 = vmatpush1.bf16.msra.mxu0 0
    %677 = vmatprep.subr.bf16.mxu0 0
    %678 = vmatpush1.bf16.msra.mxu0 0
    %679 = vmatprep.mubr.bf16.mxu0 0
    %680 = vmatmul.mubr.bf16.gmra.mrb[0].mxu0 %v646
    %v681 = vpop.f32.mrb[0].mxu0
    %v682 = vadd.f32 0.0, %v681
    %v683 = vpop.f32.mrb[0].mxu0
    %v684 = vadd.f32 0.0, %v683
    %v685 = vpop.f32.mrb[0].mxu0
    %v686 = vpop.f32.mrb[0].mxu0
    %687 = vdwg.mxu0
    %688 = vmatprep.subr.bf16.mxu0 %v235
    %689 = vmatpush1.bf16.msra.mxu0 %v234
    %690 = vmatprep.subr.bf16.mxu0 %v239
    %691 = vmatpush1.bf16.msra.mxu0 %v238
    %692 = vmatprep.subr.bf16.mxu0 %v243
    %693 = vmatpush1.bf16.msra.mxu0 %v242
    %694 = vmatprep.subr.bf16.mxu0 %v247
    %695 = vmatpush1.bf16.msra.mxu0 %v246
    %696 = vmatprep.subr.bf16.mxu0 %v251
    %697 = vmatpush1.bf16.msra.mxu0 %v250
    %698 = vmatprep.subr.bf16.mxu0 %v255
    %699 = vmatpush1.bf16.msra.mxu0 %v254
    %700 = vmatprep.subr.bf16.mxu0 %v259
    %701 = vmatpush1.bf16.msra.mxu0 %v258
    %702 = vmatprep.subr.bf16.mxu0 %v263
    %703 = vmatpush1.bf16.msra.mxu0 %v262
    %704 = vmatprep.subr.bf16.mxu0 0
    %705 = vmatpush1.bf16.msra.mxu0 0
    %706 = vmatprep.subr.bf16.mxu0 0
    %707 = vmatpush1.bf16.msra.mxu0 0
    %708 = vmatprep.subr.bf16.mxu0 0
    %709 = vmatpush1.bf16.msra.mxu0 0
    %710 = vmatprep.subr.bf16.mxu0 0
    %711 = vmatpush1.bf16.msra.mxu0 0
    %712 = vmatprep.subr.bf16.mxu0 0
    %713 = vmatpush1.bf16.msra.mxu0 0
    %714 = vmatprep.subr.bf16.mxu0 0
    %715 = vmatpush1.bf16.msra.mxu0 0
    %716 = vmatprep.subr.bf16.mxu0 0
    %717 = vmatpush1.bf16.msra.mxu0 0
    %718 = vmatprep.subr.bf16.mxu0 0
    %719 = vmatpush1.bf16.msra.mxu0 0
    %720 = vmatprep.mubr.bf16.mxu0 0
    %721 = vmatmul.mubr.bf16.gmra.mrb[0].mxu0 %v646
    %v722 = vpop.f32.mrb[0].mxu0
    %v723 = vadd.f32 0.0, %v722
    %v724 = vpop.f32.mrb[0].mxu0
    %v725 = vadd.f32 0.0, %v724
    %v726 = vpop.f32.mrb[0].mxu0
    %v727 = vpop.f32.mrb[0].mxu0
    %728 = vdwg.mxu0
    %729 = vmatprep.subr.bf16.mxu0 %v475
    %730 = vmatpush1.bf16.msra.mxu0 %v474
    %731 = vmatprep.subr.bf16.mxu0 %v479
    %732 = vmatpush1.bf16.msra.mxu0 %v478
    %733 = vmatprep.subr.bf16.mxu0 %v483
    %734 = vmatpush1.bf16.msra.mxu0 %v482
    %735 = vmatprep.subr.bf16.mxu0 %v487
    %736 = vmatpush1.bf16.msra.mxu0 %v486
    %737 = vmatprep.subr.bf16.mxu0 %v491
    %738 = vmatpush1.bf16.msra.mxu0 %v490
    %739 = vmatprep.subr.bf16.mxu0 %v495
    %740 = vmatpush1.bf16.msra.mxu0 %v494
    %741 = vmatprep.subr.bf16.mxu0 %v499
    %742 = vmatpush1.bf16.msra.mxu0 %v498
    %743 = vmatprep.subr.bf16.mxu0 %v503
    %744 = vmatpush1.bf16.msra.mxu0 %v502
    %745 = vmatprep.subr.bf16.mxu0 0
    %746 = vmatpush1.bf16.msra.mxu0 0
    %747 = vmatprep.subr.bf16.mxu0 0
    %748 = vmatpush1.bf16.msra.mxu0 0
    %749 = vmatprep.subr.bf16.mxu0 0
    %750 = vmatpush1.bf16.msra.mxu0 0
    %751 = vmatprep.subr.bf16.mxu0 0
    %752 = vmatpush1.bf16.msra.mxu0 0
    %753 = vmatprep.subr.bf16.mxu0 0
    %754 = vmatpush1.bf16.msra.mxu0 0
    %755 = vmatprep.subr.bf16.mxu0 0
    %756 = vmatpush1.bf16.msra.mxu0 0
    %757 = vmatprep.subr.bf16.mxu0 0
    %758 = vmatpush1.bf16.msra.mxu0 0
    %759 = vmatprep.subr.bf16.mxu0 0
    %760 = vmatpush1.bf16.msra.mxu0 0
    %761 = vmatprep.mubr.bf16.mxu0 0
    %762 = vmatmul.mubr.bf16.gmra.mrb[0].mxu0 %v645
    %v763 = vpop.f32.mrb[0].mxu0
    %v764 = vadd.f32 %v682, %v763
    %v765 = vpop.f32.mrb[0].mxu0
    %v766 = vadd.f32 %v684, %v765
    %v767 = vpop.f32.mrb[0].mxu0
    %v768 = vpop.f32.mrb[0].mxu0
    %769 = vdwg.mxu0
    %770 = vmatprep.subr.bf16.mxu0 %v477
    %771 = vmatpush1.bf16.msra.mxu0 %v476
    %772 = vmatprep.subr.bf16.mxu0 %v481
    %773 = vmatpush1.bf16.msra.mxu0 %v480
    %774 = vmatprep.subr.bf16.mxu0 %v485
    %775 = vmatpush1.bf16.msra.mxu0 %v484
    %776 = vmatprep.subr.bf16.mxu0 %v489
    %777 = vmatpush1.bf16.msra.mxu0 %v488
    %778 = vmatprep.subr.bf16.mxu0 %v493
    %779 = vmatpush1.bf16.msra.mxu0 %v492
    %780 = vmatprep.subr.bf16.mxu0 %v497
    %781 = vmatpush1.bf16.msra.mxu0 %v496
    %782 = vmatprep.subr.bf16.mxu0 %v501
    %783 = vmatpush1.bf16.msra.mxu0 %v500
    %784 = vmatprep.subr.bf16.mxu0 %v505
    %785 = vmatpush1.bf16.msra.mxu0 %v504
    %786 = vmatprep.subr.bf16.mxu0 0
    %787 = vmatpush1.bf16.msra.mxu0 0
    %788 = vmatprep.subr.bf16.mxu0 0
    %789 = vmatpush1.bf16.msra.mxu0 0
    %790 = vmatprep.subr.bf16.mxu0 0
    %791 = vmatpush1.bf16.msra.mxu0 0
    %792 = vmatprep.subr.bf16.mxu0 0
    %793 = vmatpush1.bf16.msra.mxu0 0
    %794 = vmatprep.subr.bf16.mxu0 0
    %795 = vmatpush1.bf16.msra.mxu0 0
    %796 = vmatprep.subr.bf16.mxu0 0
    %797 = vmatpush1.bf16.msra.mxu0 0
    %798 = vmatprep.subr.bf16.mxu0 0
    %799 = vmatpush1.bf16.msra.mxu0 0
    %800 = vmatprep.subr.bf16.mxu0 0
    %801 = vmatpush1.bf16.msra.mxu0 0
    %802 = vmatprep.mubr.bf16.mxu0 0
    %803 = vmatmul.mubr.bf16.gmra.mrb[0].mxu0 %v645
    %v804 = vpop.f32.mrb[0].mxu0
    %v805 = vadd.f32 %v723, %v804
    %v806 = vpop.f32.mrb[0].mxu0
    %v807 = vadd.f32 %v725, %v806
    %v808 = vpop.f32.mrb[0].mxu0
    %v809 = vpop.f32.mrb[0].mxu0
    %810 = vdwg.mxu0
    %v811 = vmul.f32 %v764, 0.5
    %v812 = vmul.f32 %v766, 0.5
    %v813 = vmul.f32 %v805, 0.5
    %v814 = vtanh.pop %v811
    %v815 = vtanh.pop %v812
    %v816 = vtanh.pop %v813
    %v817 = vadd.f32 %v814, 1.0
    %v818 = vadd.f32 %v815, 1.0
    %v819 = vadd.f32 %v816, 1.0
    %v820 = vmul.f32 %v817, 0.5
    %v821 = vmul.f32 %v818, 0.5
    %v822 = vmul.f32 %v819, 0.5
    %v823 = vtanh.pop %v807
    %v824 = vmul.f32 %v821, %v635
    %v825 = vmul.f32 %v820, %v823
    %v826 = vadd.f32 %v824, %v825
    %v827 = vtanh.pop %v826
    %v828 = vmul.f32 %v822, %v827
    %s829 = scalar_lea.vmem %s0, 16
    %v830 = vld [vmem:[%s829] sm:$0xff]
    %831 = vset.pattern.permute.xlu0 0
    %832 = vperm.xlu0 %831, %v830
    %v833 = vpop.permute.xlu0 %832
    %vm834 = vcmp.eq.s32.totalorder %v833, %v61
    %v835 = vsel %vm834, 1.0, 0.0
    %v836 = vpack.c.bf16 %v835, %v835
    %v837 = vpack.c.bf16 %v828, %v828
    %838 = vmatprep.subr.bf16.mxu0 %v233
    %839 = vmatpush1.bf16.msra.mxu0 %v232
    %840 = vmatprep.subr.bf16.mxu0 %v237
    %841 = vmatpush1.bf16.msra.mxu0 %v236
    %842 = vmatprep.subr.bf16.mxu0 %v241
    %843 = vmatpush1.bf16.msra.mxu0 %v240
    %844 = vmatprep.subr.bf16.mxu0 %v245
    %845 = vmatpush1.bf16.msra.mxu0 %v244
    %846 = vmatprep.subr.bf16.mxu0 %v249
    %847 = vmatpush1.bf16.msra.mxu0 %v248
    %848 = vmatprep.subr.bf16.mxu0 %v253
    %849 = vmatpush1.bf16.msra.mxu0 %v252
    %850 = vmatprep.subr.bf16.mxu0 %v257
    %851 = vmatpush1.bf16.msra.mxu0 %v256
    %852 = vmatprep.subr.bf16.mxu0 %v261
    %853 = vmatpush1.bf16.msra.mxu0 %v260
    %854 = vmatprep.subr.bf16.mxu0 0
    %855 = vmatpush1.bf16.msra.mxu0 0
    %856 = vmatprep.subr.bf16.mxu0 0
    %857 = vmatpush1.bf16.msra.mxu0 0
    %858 = vmatprep.subr.bf16.mxu0 0
    %859 = vmatpush1.bf16.msra.mxu0 0
    %860 = vmatprep.subr.bf16.mxu0 0
    %861 = vmatpush1.bf16.msra.mxu0 0
    %862 = vmatprep.subr.bf16.mxu0 0
    %863 = vmatpush1.bf16.msra.mxu0 0
    %864 = vmatprep.subr.bf16.mxu0 0
    %865 = vmatpush1.bf16.msra.mxu0 0
    %866 = vmatprep.subr.bf16.mxu0 0
    %867 = vmatpush1.bf16.msra.mxu0 0
    %868 = vmatprep.subr.bf16.mxu0 0
    %869 = vmatpush1.bf16.msra.mxu0 0
    %870 = vmatprep.mubr.bf16.mxu0 0
    %871 = vmatmul.mubr.bf16.gmra.mrb[0].mxu0 %v837
    %v872 = vpop.f32.mrb[0].mxu0
    %v873 = vadd.f32 0.0, %v872
    %v874 = vpop.f32.mrb[0].mxu0
    %v875 = vadd.f32 0.0, %v874
    %v876 = vpop.f32.mrb[0].mxu0
    %v877 = vpop.f32.mrb[0].mxu0
    %878 = vdwg.mxu0
    %879 = vmatprep.subr.bf16.mxu0 %v235
    %880 = vmatpush1.bf16.msra.mxu0 %v234
    %881 = vmatprep.subr.bf16.mxu0 %v239
    %882 = vmatpush1.bf16.msra.mxu0 %v238
    %883 = vmatprep.subr.bf16.mxu0 %v243
    %884 = vmatpush1.bf16.msra.mxu0 %v242
    %885 = vmatprep.subr.bf16.mxu0 %v247
    %886 = vmatpush1.bf16.msra.mxu0 %v246
    %887 = vmatprep.subr.bf16.mxu0 %v251
    %888 = vmatpush1.bf16.msra.mxu0 %v250
    %889 = vmatprep.subr.bf16.mxu0 %v255
    %890 = vmatpush1.bf16.msra.mxu0 %v254
    %891 = vmatprep.subr.bf16.mxu0 %v259
    %892 = vmatpush1.bf16.msra.mxu0 %v258
    %893 = vmatprep.subr.bf16.mxu0 %v263
    %894 = vmatpush1.bf16.msra.mxu0 %v262
    %895 = vmatprep.subr.bf16.mxu0 0
    %896 = vmatpush1.bf16.msra.mxu0 0
    %897 = vmatprep.subr.bf16.mxu0 0
    %898 = vmatpush1.bf16.msra.mxu0 0
    %899 = vmatprep.subr.bf16.mxu0 0
    %900 = vmatpush1.bf16.msra.mxu0 0
    %901 = vmatprep.subr.bf16.mxu0 0
    %902 = vmatpush1.bf16.msra.mxu0 0
    %903 = vmatprep.subr.bf16.mxu0 0
    %904 = vmatpush1.bf16.msra.mxu0 0
    %905 = vmatprep.subr.bf16.mxu0 0
    %906 = vmatpush1.bf16.msra.mxu0 0
    %907 = vmatprep.subr.bf16.mxu0 0
    %908 = vmatpush1.bf16.msra.mxu0 0
    %909 = vmatprep.subr.bf16.mxu0 0
    %910 = vmatpush1.bf16.msra.mxu0 0
    %911 = vmatprep.mubr.bf16.mxu0 0
    %912 = vmatmul.mubr.bf16.gmra.mrb[0].mxu0 %v837
    %v913 = vpop.f32.mrb[0].mxu0
    %v914 = vadd.f32 0.0, %v913
    %v915 = vpop.f32.mrb[0].mxu0
    %v916 = vadd.f32 0.0, %v915
    %v917 = vpop.f32.mrb[0].mxu0
    %v918 = vpop.f32.mrb[0].mxu0
    %919 = vdwg.mxu0
    %920 = vmatprep.subr.bf16.mxu0 %v475
    %921 = vmatpush1.bf16.msra.mxu0 %v474
    %922 = vmatprep.subr.bf16.mxu0 %v479
    %923 = vmatpush1.bf16.msra.mxu0 %v478
    %924 = vmatprep.subr.bf16.mxu0 %v483
    %925 = vmatpush1.bf16.msra.mxu0 %v482
    %926 = vmatprep.subr.bf16.mxu0 %v487
    %927 = vmatpush1.bf16.msra.mxu0 %v486
    %928 = vmatprep.subr.bf16.mxu0 %v491
    %929 = vmatpush1.bf16.msra.mxu0 %v490
    %930 = vmatprep.subr.bf16.mxu0 %v495
    %931 = vmatpush1.bf16.msra.mxu0 %v494
    %932 = vmatprep.subr.bf16.mxu0 %v499
    %933 = vmatpush1.bf16.msra.mxu0 %v498
    %934 = vmatprep.subr.bf16.mxu0 %v503
    %935 = vmatpush1.bf16.msra.mxu0 %v502
    %936 = vmatprep.subr.bf16.mxu0 0
    %937 = vmatpush1.bf16.msra.mxu0 0
    %938 = vmatprep.subr.bf16.mxu0 0
    %939 = vmatpush1.bf16.msra.mxu0 0
    %940 = vmatprep.subr.bf16.mxu0 0
    %941 = vmatpush1.bf16.msra.mxu0 0
    %942 = vmatprep.subr.bf16.mxu0 0
    %943 = vmatpush1.bf16.msra.mxu0 0
    %944 = vmatprep.subr.bf16.mxu0 0
    %945 = vmatpush1.bf16.msra.mxu0 0
    %946 = vmatprep.subr.bf16.mxu0 0
    %947 = vmatpush1.bf16.msra.mxu0 0
    %948 = vmatprep.subr.bf16.mxu0 0
    %949 = vmatpush1.bf16.msra.mxu0 0
    %950 = vmatprep.subr.bf16.mxu0 0
    %951 = vmatpush1.bf16.msra.mxu0 0
    %952 = vmatprep.mubr.bf16.mxu0 0
    %953 = vmatmul.mubr.bf16.gmra.mrb[0].mxu0 %v836
    %v954 = vpop.f32.mrb[0].mxu0
    %v955 = vadd.f32 %v873, %v954
    %v956 = vpop.f32.mrb[0].mxu0
    %v957 = vadd.f32 %v875, %v956
    %v958 = vpop.f32.mrb[0].mxu0
    %v959 = vpop.f32.mrb[0].mxu0
    %960 = vdwg.mxu0
    %961 = vmatprep.subr.bf16.mxu0 %v477
    %962 = vmatpush1.bf16.msra.mxu0 %v476
    %963 = vmatprep.subr.bf16.mxu0 %v481
    %964 = vmatpush1.bf16.msra.mxu0 %v480
    %965 = vmatprep.subr.bf16.mxu0 %v485
    %966 = vmatpush1.bf16.msra.mxu0 %v484
    %967 = vmatprep.subr.bf16.mxu0 %v489
    %968 = vmatpush1.bf16.msra.mxu0 %v488
    %969 = vmatprep.subr.bf16.mxu0 %v493
    %970 = vmatpush1.bf16.msra.mxu0 %v492
    %971 = vmatprep.subr.bf16.mxu0 %v497
    %972 = vmatpush1.bf16.msra.mxu0 %v496
    %973 = vmatprep.subr.bf16.mxu0 %v501
    %974 = vmatpush1.bf16.msra.mxu0 %v500
    %975 = vmatprep.subr.bf16.mxu0 %v505
    %976 = vmatpush1.bf16.msra.mxu0 %v504
    %977 = vmatprep.subr.bf16.mxu0 0
    %978 = vmatpush1.bf16.msra.mxu0 0
    %979 = vmatprep.subr.bf16.mxu0 0
    %980 = vmatpush1.bf16.msra.mxu0 0
    %981 = vmatprep.subr.bf16.mxu0 0
    %982 = vmatpush1.bf16.msra.mxu0 0
    %983 = vmatprep.subr.bf16.mxu0 0
    %984 = vmatpush1.bf16.msra.mxu0 0
    %985 = vmatprep.subr.bf16.mxu0 0
    %986 = vmatpush1.bf16.msra.mxu0 0
    %987 = vmatprep.subr.bf16.mxu0 0
    %988 = vmatpush1.bf16.msra.mxu0 0
    %989 = vmatprep.subr.bf16.mxu0 0
    %990 = vmatpush1.bf16.msra.mxu0 0
    %991 = vmatprep.subr.bf16.mxu0 0
    %992 = vmatpush1.bf16.msra.mxu0 0
    %993 = vmatprep.mubr.bf16.mxu0 0
    %994 = vmatmul.mubr.bf16.gmra.mrb[0].mxu0 %v836
    %v995 = vpop.f32.mrb[0].mxu0
    %v996 = vadd.f32 %v914, %v995
    %v997 = vpop.f32.mrb[0].mxu0
    %v998 = vadd.f32 %v916, %v997
    %v999 = vpop.f32.mrb[0].mxu0
    %v1000 = vpop.f32.mrb[0].mxu0
    %1001 = vdwg.mxu0
    %v1002 = vmul.f32 %v955, 0.5
    %v1003 = vmul.f32 %v957, 0.5
    %v1004 = vmul.f32 %v996, 0.5
    %v1005 = vtanh.pop %v1002
    %v1006 = vtanh.pop %v1003
    %v1007 = vtanh.pop %v1004
    %v1008 = vadd.f32 %v1005, 1.0
    %v1009 = vadd.f32 %v1006, 1.0
    %v1010 = vadd.f32 %v1007, 1.0
    %v1011 = vmul.f32 %v1008, 0.5
    %v1012 = vmul.f32 %v1009, 0.5
    %v1013 = vmul.f32 %v1010, 0.5
    %v1014 = vtanh.pop %v998
    %v1015 = vmul.f32 %v1012, %v826
    %v1016 = vmul.f32 %v1011, %v1014
    %v1017 = vadd.f32 %v1015, %v1016
    %v1018 = vtanh.pop %v1017
    %v1019 = vmul.f32 %v1013, %v1018
    %s1020 = scalar_lea.vmem %s0, 24
    %v1021 = vld [vmem:[%s1020] sm:$0xff]
    %1022 = vset.pattern.permute.xlu0 0
    %1023 = vperm.xlu0 %1022, %v1021
    %v1024 = vpop.permute.xlu0 %1023
    %vm1025 = vcmp.eq.s32.totalorder %v1024, %v61
    %v1026 = vsel %vm1025, 1.0, 0.0
    %v1027 = vpack.c.bf16 %v1026, %v1026
    %v1028 = vpack.c.bf16 %v1019, %v1019
    %1029 = vmatprep.subr.bf16.mxu0 %v233
    %1030 = vmatpush1.bf16.msra.mxu0 %v232
    %1031 = vmatprep.subr.bf16.mxu0 %v237
    %1032 = vmatpush1.bf16.msra.mxu0 %v236
    %1033 = vmatprep.subr.bf16.mxu0 %v241
    %1034 = vmatpush1.bf16.msra.mxu0 %v240
    %1035 = vmatprep.subr.bf16.mxu0 %v245
    %1036 = vmatpush1.bf16.msra.mxu0 %v244
    %1037 = vmatprep.subr.bf16.mxu0 %v249
    %1038 = vmatpush1.bf16.msra.mxu0 %v248
    %1039 = vmatprep.subr.bf16.mxu0 %v253
    %1040 = vmatpush1.bf16.msra.mxu0 %v252
    %1041 = vmatprep.subr.bf16.mxu0 %v257
    %1042 = vmatpush1.bf16.msra.mxu0 %v256
    %1043 = vmatprep.subr.bf16.mxu0 %v261
    %1044 = vmatpush1.bf16.msra.mxu0 %v260
    %1045 = vmatprep.subr.bf16.mxu0 0
    %1046 = vmatpush1.bf16.msra.mxu0 0
    %1047 = vmatprep.subr.bf16.mxu0 0
    %1048 = vmatpush1.bf16.msra.mxu0 0
    %1049 = vmatprep.subr.bf16.mxu0 0
    %1050 = vmatpush1.bf16.msra.mxu0 0
    %1051 = vmatprep.subr.bf16.mxu0 0
    %1052 = vmatpush1.bf16.msra.mxu0 0
    %1053 = vmatprep.subr.bf16.mxu0 0
    %1054 = vmatpush1.bf16.msra.mxu0 0
    %1055 = vmatprep.subr.bf16.mxu0 0
    %1056 = vmatpush1.bf16.msra.mxu0 0
    %1057 = vmatprep.subr.bf16.mxu0 0
    %1058 = vmatpush1.bf16.msra.mxu0 0
    %1059 = vmatprep.subr.bf16.mxu0 0
    %1060 = vmatpush1.bf16.msra.mxu0 0
    %1061 = vmatprep.mubr.bf16.mxu0 0
    %1062 = vmatmul.mubr.bf16.gmra.mrb[0].mxu0 %v1028
    %v1063 = vpop.f32.mrb[0].mxu0
    %v1064 = vadd.f32 0.0, %v1063
    %v1065 = vpop.f32.mrb[0].mxu0
    %v1066 = vadd.f32 0.0, %v1065
    %v1067 = vpop.f32.mrb[0].mxu0
    %v1068 = vpop.f32.mrb[0].mxu0
    %1069 = vdwg.mxu0
    %1070 = vmatprep.subr.bf16.mxu0 %v235
    %1071 = vmatpush1.bf16.msra.mxu0 %v234
    %1072 = vmatprep.subr.bf16.mxu0 %v239
    %1073 = vmatpush1.bf16.msra.mxu0 %v238
    %1074 = vmatprep.subr.bf16.mxu0 %v243
    %1075 = vmatpush1.bf16.msra.mxu0 %v242
    %1076 = vmatprep.subr.bf16.mxu0 %v247
    %1077 = vmatpush1.bf16.msra.mxu0 %v246
    %1078 = vmatprep.subr.bf16.mxu0 %v251
    %1079 = vmatpush1.bf16.msra.mxu0 %v250
    %1080 = vmatprep.subr.bf16.mxu0 %v255
    %1081 = vmatpush1.bf16.msra.mxu0 %v254
    %1082 = vmatprep.subr.bf16.mxu0 %v259
    %1083 = vmatpush1.bf16.msra.mxu0 %v258
    %1084 = vmatprep.subr.bf16.mxu0 %v263
    %1085 = vmatpush1.bf16.msra.mxu0 %v262
    %1086 = vmatprep.subr.bf16.mxu0 0
    %1087 = vmatpush1.bf16.msra.mxu0 0
    %1088 = vmatprep.subr.bf16.mxu0 0
    %1089 = vmatpush1.bf16.msra.mxu0 0
    %1090 = vmatprep.subr.bf16.mxu0 0
    %1091 = vmatpush1.bf16.msra.mxu0 0
    %1092 = vmatprep.subr.bf16.mxu0 0
    %1093 = vmatpush1.bf16.msra.mxu0 0
    %1094 = vmatprep.subr.bf16.mxu0 0
    %1095 = vmatpush1.bf16.msra.mxu0 0
    %1096 = vmatprep.subr.bf16.mxu0 0
    %1097 = vmatpush1.bf16.msra.mxu0 0
    %1098 = vmatprep.subr.bf16.mxu0 0
    %1099 = vmatpush1.bf16.msra.mxu0 0
    %1100 = vmatprep.subr.bf16.mxu0 0
    %1101 = vmatpush1.bf16.msra.mxu0 0
    %1102 = vmatprep.mubr.bf16.mxu0 0
    %1103 = vmatmul.mubr.bf16.gmra.mrb[0].mxu0 %v1028
    %v1104 = vpop.f32.mrb[0].mxu0
    %v1105 = vadd.f32 0.0, %v1104
    %v1106 = vpop.f32.mrb[0].mxu0
    %v1107 = vadd.f32 0.0, %v1106
    %v1108 = vpop.f32.mrb[0].mxu0
    %v1109 = vpop.f32.mrb[0].mxu0
    %1110 = vdwg.mxu0
    %1111 = vmatprep.subr.bf16.mxu0 %v475
    %1112 = vmatpush1.bf16.msra.mxu0 %v474
    %1113 = vmatprep.subr.bf16.mxu0 %v479
    %1114 = vmatpush1.bf16.msra.mxu0 %v478
    %1115 = vmatprep.subr.bf16.mxu0 %v483
    %1116 = vmatpush1.bf16.msra.mxu0 %v482
    %1117 = vmatprep.subr.bf16.mxu0 %v487
    %1118 = vmatpush1.bf16.msra.mxu0 %v486
    %1119 = vmatprep.subr.bf16.mxu0 %v491
    %1120 = vmatpush1.bf16.msra.mxu0 %v490
    %1121 = vmatprep.subr.bf16.mxu0 %v495
    %1122 = vmatpush1.bf16.msra.mxu0 %v494
    %1123 = vmatprep.subr.bf16.mxu0 %v499
    %1124 = vmatpush1.bf16.msra.mxu0 %v498
    %1125 = vmatprep.subr.bf16.mxu0 %v503
    %1126 = vmatpush1.bf16.msra.mxu0 %v502
    %1127 = vmatprep.subr.bf16.mxu0 0
    %1128 = vmatpush1.bf16.msra.mxu0 0
    %1129 = vmatprep.subr.bf16.mxu0 0
    %1130 = vmatpush1.bf16.msra.mxu0 0
    %1131 = vmatprep.subr.bf16.mxu0 0
    %1132 = vmatpush1.bf16.msra.mxu0 0
    %1133 = vmatprep.subr.bf16.mxu0 0
    %1134 = vmatpush1.bf16.msra.mxu0 0
    %1135 = vmatprep.subr.bf16.mxu0 0
    %1136 = vmatpush1.bf16.msra.mxu0 0
    %1137 = vmatprep.subr.bf16.mxu0 0
    %1138 = vmatpush1.bf16.msra.mxu0 0
    %1139 = vmatprep.subr.bf16.mxu0 0
    %1140 = vmatpush1.bf16.msra.mxu0 0
    %1141 = vmatprep.subr.bf16.mxu0 0
    %1142 = vmatpush1.bf16.msra.mxu0 0
    %1143 = vmatprep.mubr.bf16.mxu0 0
    %1144 = vmatmul.mubr.bf16.gmra.mrb[0].mxu0 %v1027
    %v1145 = vpop.f32.mrb[0].mxu0
    %v1146 = vadd.f32 %v1064, %v1145
    %v1147 = vpop.f32.mrb[0].mxu0
    %v1148 = vadd.f32 %v1066, %v1147
    %v1149 = vpop.f32.mrb[0].mxu0
    %v1150 = vpop.f32.mrb[0].mxu0
    %1151 = vdwg.mxu0
    %1152 = vmatprep.subr.bf16.mxu0 %v477
    %1153 = vmatpush1.bf16.msra.mxu0 %v476
    %1154 = vmatprep.subr.bf16.mxu0 %v481
    %1155 = vmatpush1.bf16.msra.mxu0 %v480
    %1156 = vmatprep.subr.bf16.mxu0 %v485
    %1157 = vmatpush1.bf16.msra.mxu0 %v484
    %1158 = vmatprep.subr.bf16.mxu0 %v489
    %1159 = vmatpush1.bf16.msra.mxu0 %v488
    %1160 = vmatprep.subr.bf16.mxu0 %v493
    %1161 = vmatpush1.bf16.msra.mxu0 %v492
    %1162 = vmatprep.subr.bf16.mxu0 %v497
    %1163 = vmatpush1.bf16.msra.mxu0 %v496
    %1164 = vmatprep.subr.bf16.mxu0 %v501
    %1165 = vmatpush1.bf16.msra.mxu0 %v500
    %1166 = vmatprep.subr.bf16.mxu0 %v505
    %1167 = vmatpush1.bf16.msra.mxu0 %v504
    %1168 = vmatprep.subr.bf16.mxu0 0
    %1169 = vmatpush1.bf16.msra.mxu0 0
    %1170 = vmatprep.subr.bf16.mxu0 0
    %1171 = vmatpush1.bf16.msra.mxu0 0
    %1172 = vmatprep.subr.bf16.mxu0 0
    %1173 = vmatpush1.bf16.msra.mxu0 0
    %1174 = vmatprep.subr.bf16.mxu0 0
    %1175 = vmatpush1.bf16.msra.mxu0 0
    %1176 = vmatprep.subr.bf16.mxu0 0
    %1177 = vmatpush1.bf16.msra.mxu0 0
    %1178 = vmatprep.subr.bf16.mxu0 0
    %1179 = vmatpush1.bf16.msra.mxu0 0
    %1180 = vmatprep.subr.bf16.mxu0 0
    %1181 = vmatpush1.bf16.msra.mxu0 0
    %1182 = vmatprep.subr.bf16.mxu0 0
    %1183 = vmatpush1.bf16.msra.mxu0 0
    %1184 = vmatprep.mubr.bf16.mxu0 0
    %1185 = vmatmul.mubr.bf16.gmra.mrb[0].mxu0 %v1027
    %v1186 = vpop.f32.mrb[0].mxu0
    %v1187 = vadd.f32 %v1105, %v1186
    %v1188 = vpop.f32.mrb[0].mxu0
    %v1189 = vadd.f32 %v1107, %v1188
    %v1190 = vpop.f32.mrb[0].mxu0
    %v1191 = vpop.f32.mrb[0].mxu0
    %1192 = vdwg.mxu0
    %v1193 = vmul.f32 %v1146, 0.5
    %v1194 = vmul.f32 %v1148, 0.5
    %v1195 = vmul.f32 %v1187, 0.5
    %v1196 = vtanh.pop %v1193
    %v1197 = vtanh.pop %v1194
    %v1198 = vtanh.pop %v1195
    %v1199 = vadd.f32 %v1196, 1.0
    %v1200 = vadd.f32 %v1197, 1.0
    %v1201 = vadd.f32 %v1198, 1.0
    %v1202 = vmul.f32 %v1199, 0.5
    %v1203 = vmul.f32 %v1200, 0.5
    %v1204 = vmul.f32 %v1201, 0.5
    %v1205 = vtanh.pop %v1189
    %v1206 = vmul.f32 %v1203, %v1017
    %v1207 = vmul.f32 %v1202, %v1205
    %v1208 = vadd.f32 %v1206, %v1207
    %v1209 = vtanh.pop %v1208
    %v1210 = vmul.f32 %v1204, %v1209
    %s1211 = scalar_lea.vmem %s0, 32
    %v1212 = vld [vmem:[%s1211] sm:$0xff]
    %1213 = vset.pattern.permute.xlu0 0
    %1214 = vperm.xlu0 %1213, %v1212
    %v1215 = vpop.permute.xlu0 %1214
    %vm1216 = vcmp.eq.s32.totalorder %v1215, %v61
    %v1217 = vsel %vm1216, 1.0, 0.0
    %v1218 = vpack.c.bf16 %v1217, %v1217
    %v1219 = vpack.c.bf16 %v1210, %v1210
    %1220 = vmatprep.subr.bf16.mxu0 %v233
    %1221 = vmatpush1.bf16.msra.mxu0 %v232
    %1222 = vmatprep.subr.bf16.mxu0 %v237
    %1223 = vmatpush1.bf16.msra.mxu0 %v236
    %1224 = vmatprep.subr.bf16.mxu0 %v241
    %1225 = vmatpush1.bf16.msra.mxu0 %v240
    %1226 = vmatprep.subr.bf16.mxu0 %v245
    %1227 = vmatpush1.bf16.msra.mxu0 %v244
    %1228 = vmatprep.subr.bf16.mxu0 %v249
    %1229 = vmatpush1.bf16.msra.mxu0 %v248
    %1230 = vmatprep.subr.bf16.mxu0 %v253
    %1231 = vmatpush1.bf16.msra.mxu0 %v252
    %1232 = vmatprep.subr.bf16.mxu0 %v257
    %1233 = vmatpush1.bf16.msra.mxu0 %v256
    %1234 = vmatprep.subr.bf16.mxu0 %v261
    %1235 = vmatpush1.bf16.msra.mxu0 %v260
    %1236 = vmatprep.subr.bf16.mxu0 0
    %1237 = vmatpush1.bf16.msra.mxu0 0
    %1238 = vmatprep.subr.bf16.mxu0 0
    %1239 = vmatpush1.bf16.msra.mxu0 0
    %1240 = vmatprep.subr.bf16.mxu0 0
    %1241 = vmatpush1.bf16.msra.mxu0 0
    %1242 = vmatprep.subr.bf16.mxu0 0
    %1243 = vmatpush1.bf16.msra.mxu0 0
    %1244 = vmatprep.subr.bf16.mxu0 0
    %1245 = vmatpush1.bf16.msra.mxu0 0
    %1246 = vmatprep.subr.bf16.mxu0 0
    %1247 = vmatpush1.bf16.msra.mxu0 0
    %1248 = vmatprep.subr.bf16.mxu0 0
    %1249 = vmatpush1.bf16.msra.mxu0 0
    %1250 = vmatprep.subr.bf16.mxu0 0
    %1251 = vmatpush1.bf16.msra.mxu0 0
    %1252 = vmatprep.mubr.bf16.mxu0 0
    %1253 = vmatmul.mubr.bf16.gmra.mrb[0].mxu0 %v1219
    %v1254 = vpop.f32.mrb[0].mxu0
    %v1255 = vadd.f32 0.0, %v1254
    %v1256 = vpop.f32.mrb[0].mxu0
    %v1257 = vadd.f32 0.0, %v1256
    %v1258 = vpop.f32.mrb[0].mxu0
    %v1259 = vpop.f32.mrb[0].mxu0
    %1260 = vdwg.mxu0
    %1261 = vmatprep.subr.bf16.mxu0 %v235
    %1262 = vmatpush1.bf16.msra.mxu0 %v234
    %1263 = vmatprep.subr.bf16.mxu0 %v239
    %1264 = vmatpush1.bf16.msra.mxu0 %v238
    %1265 = vmatprep.subr.bf16.mxu0 %v243
    %1266 = vmatpush1.bf16.msra.mxu0 %v242
    %1267 = vmatprep.subr.bf16.mxu0 %v247
    %1268 = vmatpush1.bf16.msra.mxu0 %v246
    %1269 = vmatprep.subr.bf16.mxu0 %v251
    %1270 = vmatpush1.bf16.msra.mxu0 %v250
    %1271 = vmatprep.subr.bf16.mxu0 %v255
    %1272 = vmatpush1.bf16.msra.mxu0 %v254
    %1273 = vmatprep.subr.bf16.mxu0 %v259
    %1274 = vmatpush1.bf16.msra.mxu0 %v258
    %1275 = vmatprep.subr.bf16.mxu0 %v263
    %1276 = vmatpush1.bf16.msra.mxu0 %v262
    %1277 = vmatprep.subr.bf16.mxu0 0
    %1278 = vmatpush1.bf16.msra.mxu0 0
    %1279 = vmatprep.subr.bf16.mxu0 0
    %1280 = vmatpush1.bf16.msra.mxu0 0
    %1281 = vmatprep.subr.bf16.mxu0 0
    %1282 = vmatpush1.bf16.msra.mxu0 0
    %1283 = vmatprep.subr.bf16.mxu0 0
    %1284 = vmatpush1.bf16.msra.mxu0 0
    %1285 = vmatprep.subr.bf16.mxu0 0
    %1286 = vmatpush1.bf16.msra.mxu0 0
    %1287 = vmatprep.subr.bf16.mxu0 0
    %1288 = vmatpush1.bf16.msra.mxu0 0
    %1289 = vmatprep.subr.bf16.mxu0 0
    %1290 = vmatpush1.bf16.msra.mxu0 0
    %1291 = vmatprep.subr.bf16.mxu0 0
    %1292 = vmatpush1.bf16.msra.mxu0 0
    %1293 = vmatprep.mubr.bf16.mxu0 0
    %1294 = vmatmul.mubr.bf16.gmra.mrb[0].mxu0 %v1219
    %v1295 = vpop.f32.mrb[0].mxu0
    %v1296 = vadd.f32 0.0, %v1295
    %v1297 = vpop.f32.mrb[0].mxu0
    %v1298 = vadd.f32 0.0, %v1297
    %v1299 = vpop.f32.mrb[0].mxu0
    %v1300 = vpop.f32.mrb[0].mxu0
    %1301 = vdwg.mxu0
    %1302 = vmatprep.subr.bf16.mxu0 %v475
    %1303 = vmatpush1.bf16.msra.mxu0 %v474
    %1304 = vmatprep.subr.bf16.mxu0 %v479
    %1305 = vmatpush1.bf16.msra.mxu0 %v478
    %1306 = vmatprep.subr.bf16.mxu0 %v483
    %1307 = vmatpush1.bf16.msra.mxu0 %v482
    %1308 = vmatprep.subr.bf16.mxu0 %v487
    %1309 = vmatpush1.bf16.msra.mxu0 %v486
    %1310 = vmatprep.subr.bf16.mxu0 %v491
    %1311 = vmatpush1.bf16.msra.mxu0 %v490
    %1312 = vmatprep.subr.bf16.mxu0 %v495
    %1313 = vmatpush1.bf16.msra.mxu0 %v494
    %1314 = vmatprep.subr.bf16.mxu0 %v499
    %1315 = vmatpush1.bf16.msra.mxu0 %v498
    %1316 = vmatprep.subr.bf16.mxu0 %v503
    %1317 = vmatpush1.bf16.msra.mxu0 %v502
    %1318 = vmatprep.subr.bf16.mxu0 0
    %1319 = vmatpush1.bf16.msra.mxu0 0
    %1320 = vmatprep.subr.bf16.mxu0 0
    %1321 = vmatpush1.bf16.msra.mxu0 0
    %1322 = vmatprep.subr.bf16.mxu0 0
    %1323 = vmatpush1.bf16.msra.mxu0 0
    %1324 = vmatprep.subr.bf16.mxu0 0
    %1325 = vmatpush1.bf16.msra.mxu0 0
    %1326 = vmatprep.subr.bf16.mxu0 0
    %1327 = vmatpush1.bf16.msra.mxu0 0
    %1328 = vmatprep.subr.bf16.mxu0 0
    %1329 = vmatpush1.bf16.msra.mxu0 0
    %1330 = vmatprep.subr.bf16.mxu0 0
    %1331 = vmatpush1.bf16.msra.mxu0 0
    %1332 = vmatprep.subr.bf16.mxu0 0
    %1333 = vmatpush1.bf16.msra.mxu0 0
    %1334 = vmatprep.mubr.bf16.mxu0 0
    %1335 = vmatmul.mubr.bf16.gmra.mrb[0].mxu0 %v1218
    %v1336 = vpop.f32.mrb[0].mxu0
    %v1337 = vadd.f32 %v1255, %v1336
    %v1338 = vpop.f32.mrb[0].mxu0
    %v1339 = vadd.f32 %v1257, %v1338
    %v1340 = vpop.f32.mrb[0].mxu0
    %v1341 = vpop.f32.mrb[0].mxu0
    %1342 = vdwg.mxu0
    %1343 = vmatprep.subr.bf16.mxu0 %v477
    %1344 = vmatpush1.bf16.msra.mxu0 %v476
    %1345 = vmatprep.subr.bf16.mxu0 %v481
    %1346 = vmatpush1.bf16.msra.mxu0 %v480
    %1347 = vmatprep.subr.bf16.mxu0 %v485
    %1348 = vmatpush1.bf16.msra.mxu0 %v484
    %1349 = vmatprep.subr.bf16.mxu0 %v489
    %1350 = vmatpush1.bf16.msra.mxu0 %v488
    %1351 = vmatprep.subr.bf16.mxu0 %v493
    %1352 = vmatpush1.bf16.msra.mxu0 %v492
    %1353 = vmatprep.subr.bf16.mxu0 %v497
    %1354 = vmatpush1.bf16.msra.mxu0 %v496
    %1355 = vmatprep.subr.bf16.mxu0 %v501
    %1356 = vmatpush1.bf16.msra.mxu0 %v500
    %1357 = vmatprep.subr.bf16.mxu0 %v505
    %1358 = vmatpush1.bf16.msra.mxu0 %v504
    %1359 = vmatprep.subr.bf16.mxu0 0
    %1360 = vmatpush1.bf16.msra.mxu0 0
    %1361 = vmatprep.subr.bf16.mxu0 0
    %1362 = vmatpush1.bf16.msra.mxu0 0
    %1363 = vmatprep.subr.bf16.mxu0 0
    %1364 = vmatpush1.bf16.msra.mxu0 0
    %1365 = vmatprep.subr.bf16.mxu0 0
    %1366 = vmatpush1.bf16.msra.mxu0 0
    %1367 = vmatprep.subr.bf16.mxu0 0
    %1368 = vmatpush1.bf16.msra.mxu0 0
    %1369 = vmatprep.subr.bf16.mxu0 0
    %1370 = vmatpush1.bf16.msra.mxu0 0
    %1371 = vmatprep.subr.bf16.mxu0 0
    %1372 = vmatpush1.bf16.msra.mxu0 0
    %1373 = vmatprep.subr.bf16.mxu0 0
    %1374 = vmatpush1.bf16.msra.mxu0 0
    %1375 = vmatprep.mubr.bf16.mxu0 0
    %1376 = vmatmul.mubr.bf16.gmra.mrb[0].mxu0 %v1218
    %v1377 = vpop.f32.mrb[0].mxu0
    %v1378 = vadd.f32 %v1296, %v1377
    %v1379 = vpop.f32.mrb[0].mxu0
    %v1380 = vadd.f32 %v1298, %v1379
    %v1381 = vpop.f32.mrb[0].mxu0
    %v1382 = vpop.f32.mrb[0].mxu0
    %1383 = vdwg.mxu0
    %v1384 = vmul.f32 %v1337, 0.5
    %v1385 = vmul.f32 %v1339, 0.5
    %v1386 = vmul.f32 %v1378, 0.5
    %v1387 = vtanh.pop %v1384
    %v1388 = vtanh.pop %v1385
    %v1389 = vtanh.pop %v1386
    %v1390 = vadd.f32 %v1387, 1.0
    %v1391 = vadd.f32 %v1388, 1.0
    %v1392 = vadd.f32 %v1389, 1.0
    %v1393 = vmul.f32 %v1390, 0.5
    %v1394 = vmul.f32 %v1391, 0.5
    %v1395 = vmul.f32 %v1392, 0.5
    %v1396 = vtanh.pop %v1380
    %v1397 = vmul.f32 %v1394, %v1208
    %v1398 = vmul.f32 %v1393, %v1396
    %v1399 = vadd.f32 %v1397, %v1398
    %v1400 = vtanh.pop %v1399
    %v1401 = vmul.f32 %v1395, %v1400
    %s1402 = scalar_lea.vmem %s0, 40
    %v1403 = vld [vmem:[%s1402] sm:$0xff]
    %1404 = vset.pattern.permute.xlu0 0
    %1405 = vperm.xlu0 %1404, %v1403
    %v1406 = vpop.permute.xlu0 %1405
    %vm1407 = vcmp.eq.s32.totalorder %v1406, %v61
    %v1408 = vsel %vm1407, 1.0, 0.0
    %v1409 = vpack.c.bf16 %v1408, %v1408
    %v1410 = vpack.c.bf16 %v1401, %v1401
    %1411 = vmatprep.subr.bf16.mxu0 %v233
    %1412 = vmatpush1.bf16.msra.mxu0 %v232
    %1413 = vmatprep.subr.bf16.mxu0 %v237
    %1414 = vmatpush1.bf16.msra.mxu0 %v236
    %1415 = vmatprep.subr.bf16.mxu0 %v241
    %1416 = vmatpush1.bf16.msra.mxu0 %v240
    %1417 = vmatprep.subr.bf16.mxu0 %v245
    %1418 = vmatpush1.bf16.msra.mxu0 %v244
    %1419 = vmatprep.subr.bf16.mxu0 %v249
    %1420 = vmatpush1.bf16.msra.mxu0 %v248
    %1421 = vmatprep.subr.bf16.mxu0 %v253
    %1422 = vmatpush1.bf16.msra.mxu0 %v252
    %1423 = vmatprep.subr.bf16.mxu0 %v257
    %1424 = vmatpush1.bf16.msra.mxu0 %v256
    %1425 = vmatprep.subr.bf16.mxu0 %v261
    %1426 = vmatpush1.bf16.msra.mxu0 %v260
    %1427 = vmatprep.subr.bf16.mxu0 0
    %1428 = vmatpush1.bf16.msra.mxu0 0
    %1429 = vmatprep.subr.bf16.mxu0 0
    %1430 = vmatpush1.bf16.msra.mxu0 0
    %1431 = vmatprep.subr.bf16.mxu0 0
    %1432 = vmatpush1.bf16.msra.mxu0 0
    %1433 = vmatprep.subr.bf16.mxu0 0
    %1434 = vmatpush1.bf16.msra.mxu0 0
    %1435 = vmatprep.subr.bf16.mxu0 0
    %1436 = vmatpush1.bf16.msra.mxu0 0
    %1437 = vmatprep.subr.bf16.mxu0 0
    %1438 = vmatpush1.bf16.msra.mxu0 0
    %1439 = vmatprep.subr.bf16.mxu0 0
    %1440 = vmatpush1.bf16.msra.mxu0 0
    %1441 = vmatprep.subr.bf16.mxu0 0
    %1442 = vmatpush1.bf16.msra.mxu0 0
    %1443 = vmatprep.mubr.bf16.mxu0 0
    %1444 = vmatmul.mubr.bf16.gmra.mrb[0].mxu0 %v1410
    %v1445 = vpop.f32.mrb[0].mxu0
    %v1446 = vadd.f32 0.0, %v1445
    %v1447 = vpop.f32.mrb[0].mxu0
    %v1448 = vadd.f32 0.0, %v1447
    %v1449 = vpop.f32.mrb[0].mxu0
    %v1450 = vpop.f32.mrb[0].mxu0
    %1451 = vdwg.mxu0
    %1452 = vmatprep.subr.bf16.mxu0 %v235
    %1453 = vmatpush1.bf16.msra.mxu0 %v234
    %1454 = vmatprep.subr.bf16.mxu0 %v239
    %1455 = vmatpush1.bf16.msra.mxu0 %v238
    %1456 = vmatprep.subr.bf16.mxu0 %v243
    %1457 = vmatpush1.bf16.msra.mxu0 %v242
    %1458 = vmatprep.subr.bf16.mxu0 %v247
    %1459 = vmatpush1.bf16.msra.mxu0 %v246
    %1460 = vmatprep.subr.bf16.mxu0 %v251
    %1461 = vmatpush1.bf16.msra.mxu0 %v250
    %1462 = vmatprep.subr.bf16.mxu0 %v255
    %1463 = vmatpush1.bf16.msra.mxu0 %v254
    %1464 = vmatprep.subr.bf16.mxu0 %v259
    %1465 = vmatpush1.bf16.msra.mxu0 %v258
    %1466 = vmatprep.subr.bf16.mxu0 %v263
    %1467 = vmatpush1.bf16.msra.mxu0 %v262
    %1468 = vmatprep.subr.bf16.mxu0 0
    %1469 = vmatpush1.bf16.msra.mxu0 0
    %1470 = vmatprep.subr.bf16.mxu0 0
    %1471 = vmatpush1.bf16.msra.mxu0 0
    %1472 = vmatprep.subr.bf16.mxu0 0
    %1473 = vmatpush1.bf16.msra.mxu0 0
    %1474 = vmatprep.subr.bf16.mxu0 0
    %1475 = vmatpush1.bf16.msra.mxu0 0
    %1476 = vmatprep.subr.bf16.mxu0 0
    %1477 = vmatpush1.bf16.msra.mxu0 0
    %1478 = vmatprep.subr.bf16.mxu0 0
    %1479 = vmatpush1.bf16.msra.mxu0 0
    %1480 = vmatprep.subr.bf16.mxu0 0
    %1481 = vmatpush1.bf16.msra.mxu0 0
    %1482 = vmatprep.subr.bf16.mxu0 0
    %1483 = vmatpush1.bf16.msra.mxu0 0
    %1484 = vmatprep.mubr.bf16.mxu0 0
    %1485 = vmatmul.mubr.bf16.gmra.mrb[0].mxu0 %v1410
    %v1486 = vpop.f32.mrb[0].mxu0
    %v1487 = vadd.f32 0.0, %v1486
    %v1488 = vpop.f32.mrb[0].mxu0
    %v1489 = vadd.f32 0.0, %v1488
    %v1490 = vpop.f32.mrb[0].mxu0
    %v1491 = vpop.f32.mrb[0].mxu0
    %1492 = vdwg.mxu0
    %1493 = vmatprep.subr.bf16.mxu0 %v475
    %1494 = vmatpush1.bf16.msra.mxu0 %v474
    %1495 = vmatprep.subr.bf16.mxu0 %v479
    %1496 = vmatpush1.bf16.msra.mxu0 %v478
    %1497 = vmatprep.subr.bf16.mxu0 %v483
    %1498 = vmatpush1.bf16.msra.mxu0 %v482
    %1499 = vmatprep.subr.bf16.mxu0 %v487
    %1500 = vmatpush1.bf16.msra.mxu0 %v486
    %1501 = vmatprep.subr.bf16.mxu0 %v491
    %1502 = vmatpush1.bf16.msra.mxu0 %v490
    %1503 = vmatprep.subr.bf16.mxu0 %v495
    %1504 = vmatpush1.bf16.msra.mxu0 %v494
    %1505 = vmatprep.subr.bf16.mxu0 %v499
    %1506 = vmatpush1.bf16.msra.mxu0 %v498
    %1507 = vmatprep.subr.bf16.mxu0 %v503
    %1508 = vmatpush1.bf16.msra.mxu0 %v502
    %1509 = vmatprep.subr.bf16.mxu0 0
    %1510 = vmatpush1.bf16.msra.mxu0 0
    %1511 = vmatprep.subr.bf16.mxu0 0
    %1512 = vmatpush1.bf16.msra.mxu0 0
    %1513 = vmatprep.subr.bf16.mxu0 0
    %1514 = vmatpush1.bf16.msra.mxu0 0
    %1515 = vmatprep.subr.bf16.mxu0 0
    %1516 = vmatpush1.bf16.msra.mxu0 0
    %1517 = vmatprep.subr.bf16.mxu0 0
    %1518 = vmatpush1.bf16.msra.mxu0 0
    %1519 = vmatprep.subr.bf16.mxu0 0
    %1520 = vmatpush1.bf16.msra.mxu0 0
    %1521 = vmatprep.subr.bf16.mxu0 0
    %1522 = vmatpush1.bf16.msra.mxu0 0
    %1523 = vmatprep.subr.bf16.mxu0 0
    %1524 = vmatpush1.bf16.msra.mxu0 0
    %1525 = vmatprep.mubr.bf16.mxu0 0
    %1526 = vmatmul.mubr.bf16.gmra.mrb[0].mxu0 %v1409
    %v1527 = vpop.f32.mrb[0].mxu0
    %v1528 = vadd.f32 %v1446, %v1527
    %v1529 = vpop.f32.mrb[0].mxu0
    %v1530 = vadd.f32 %v1448, %v1529
    %v1531 = vpop.f32.mrb[0].mxu0
    %v1532 = vpop.f32.mrb[0].mxu0
    %1533 = vdwg.mxu0
    %1534 = vmatprep.subr.bf16.mxu0 %v477
    %1535 = vmatpush1.bf16.msra.mxu0 %v476
    %1536 = vmatprep.subr.bf16.mxu0 %v481
    %1537 = vmatpush1.bf16.msra.mxu0 %v480
    %1538 = vmatprep.subr.bf16.mxu0 %v485
    %1539 = vmatpush1.bf16.msra.mxu0 %v484
    %1540 = vmatprep.subr.bf16.mxu0 %v489
    %1541 = vmatpush1.bf16.msra.mxu0 %v488
    %1542 = vmatprep.subr.bf16.mxu0 %v493
    %1543 = vmatpush1.bf16.msra.mxu0 %v492
    %1544 = vmatprep.subr.bf16.mxu0 %v497
    %1545 = vmatpush1.bf16.msra.mxu0 %v496
    %1546 = vmatprep.subr.bf16.mxu0 %v501
    %1547 = vmatpush1.bf16.msra.mxu0 %v500
    %1548 = vmatprep.subr.bf16.mxu0 %v505
    %1549 = vmatpush1.bf16.msra.mxu0 %v504
    %1550 = vmatprep.subr.bf16.mxu0 0
    %1551 = vmatpush1.bf16.msra.mxu0 0
    %1552 = vmatprep.subr.bf16.mxu0 0
    %1553 = vmatpush1.bf16.msra.mxu0 0
    %1554 = vmatprep.subr.bf16.mxu0 0
    %1555 = vmatpush1.bf16.msra.mxu0 0
    %1556 = vmatprep.subr.bf16.mxu0 0
    %1557 = vmatpush1.bf16.msra.mxu0 0
    %1558 = vmatprep.subr.bf16.mxu0 0
    %1559 = vmatpush1.bf16.msra.mxu0 0
    %1560 = vmatprep.subr.bf16.mxu0 0
    %1561 = vmatpush1.bf16.msra.mxu0 0
    %1562 = vmatprep.subr.bf16.mxu0 0
    %1563 = vmatpush1.bf16.msra.mxu0 0
    %1564 = vmatprep.subr.bf16.mxu0 0
    %1565 = vmatpush1.bf16.msra.mxu0 0
    %1566 = vmatprep.mubr.bf16.mxu0 0
    %1567 = vmatmul.mubr.bf16.gmra.mrb[0].mxu0 %v1409
    %v1568 = vpop.f32.mrb[0].mxu0
    %v1569 = vadd.f32 %v1487, %v1568
    %v1570 = vpop.f32.mrb[0].mxu0
    %v1571 = vadd.f32 %v1489, %v1570
    %v1572 = vpop.f32.mrb[0].mxu0
    %v1573 = vpop.f32.mrb[0].mxu0
    %1574 = vdwg.mxu0
    %v1575 = vmul.f32 %v1528, 0.5
    %v1576 = vmul.f32 %v1530, 0.5
    %v1577 = vmul.f32 %v1569, 0.5
    %v1578 = vtanh.pop %v1575
    %v1579 = vtanh.pop %v1576
    %v1580 = vtanh.pop %v1577
    %v1581 = vadd.f32 %v1578, 1.0
    %v1582 = vadd.f32 %v1579, 1.0
    %v1583 = vadd.f32 %v1580, 1.0
    %v1584 = vmul.f32 %v1581, 0.5
    %v1585 = vmul.f32 %v1582, 0.5
    %v1586 = vmul.f32 %v1583, 0.5
    %v1587 = vtanh.pop %v1571
    %v1588 = vmul.f32 %v1585, %v1399
    %v1589 = vmul.f32 %v1584, %v1587
    %v1590 = vadd.f32 %v1588, %v1589
    %v1591 = vtanh.pop %v1590
    %v1592 = vmul.f32 %v1586, %v1591
    %s1593 = scalar_lea.vmem %s0, 48
    %v1594 = vld [vmem:[%s1593] sm:$0xff]
    %1595 = vset.pattern.permute.xlu0 0
    %1596 = vperm.xlu0 %1595, %v1594
    %v1597 = vpop.permute.xlu0 %1596
    %vm1598 = vcmp.eq.s32.totalorder %v1597, %v61
    %v1599 = vsel %vm1598, 1.0, 0.0
    %v1600 = vpack.c.bf16 %v1599, %v1599
    %v1601 = vpack.c.bf16 %v1592, %v1592
    %1602 = vmatprep.subr.bf16.mxu0 %v233
    %1603 = vmatpush1.bf16.msra.mxu0 %v232
    %1604 = vmatprep.subr.bf16.mxu0 %v237
    %1605 = vmatpush1.bf16.msra.mxu0 %v236
    %1606 = vmatprep.subr.bf16.mxu0 %v241
    %1607 = vmatpush1.bf16.msra.mxu0 %v240
    %1608 = vmatprep.subr.bf16.mxu0 %v245
    %1609 = vmatpush1.bf16.msra.mxu0 %v244
    %1610 = vmatprep.subr.bf16.mxu0 %v249
    %1611 = vmatpush1.bf16.msra.mxu0 %v248
    %1612 = vmatprep.subr.bf16.mxu0 %v253
    %1613 = vmatpush1.bf16.msra.mxu0 %v252
    %1614 = vmatprep.subr.bf16.mxu0 %v257
    %1615 = vmatpush1.bf16.msra.mxu0 %v256
    %1616 = vmatprep.subr.bf16.mxu0 %v261
    %1617 = vmatpush1.bf16.msra.mxu0 %v260
    %1618 = vmatprep.subr.bf16.mxu0 0
    %1619 = vmatpush1.bf16.msra.mxu0 0
    %1620 = vmatprep.subr.bf16.mxu0 0
    %1621 = vmatpush1.bf16.msra.mxu0 0
    %1622 = vmatprep.subr.bf16.mxu0 0
    %1623 = vmatpush1.bf16.msra.mxu0 0
    %1624 = vmatprep.subr.bf16.mxu0 0
    %1625 = vmatpush1.bf16.msra.mxu0 0
    %1626 = vmatprep.subr.bf16.mxu0 0
    %1627 = vmatpush1.bf16.msra.mxu0 0
    %1628 = vmatprep.subr.bf16.mxu0 0
    %1629 = vmatpush1.bf16.msra.mxu0 0
    %1630 = vmatprep.subr.bf16.mxu0 0
    %1631 = vmatpush1.bf16.msra.mxu0 0
    %1632 = vmatprep.subr.bf16.mxu0 0
    %1633 = vmatpush1.bf16.msra.mxu0 0
    %1634 = vmatprep.mubr.bf16.mxu0 0
    %1635 = vmatmul.mubr.bf16.gmra.mrb[0].mxu0 %v1601
    %v1636 = vpop.f32.mrb[0].mxu0
    %v1637 = vadd.f32 0.0, %v1636
    %v1638 = vpop.f32.mrb[0].mxu0
    %v1639 = vadd.f32 0.0, %v1638
    %v1640 = vpop.f32.mrb[0].mxu0
    %v1641 = vpop.f32.mrb[0].mxu0
    %1642 = vdwg.mxu0
    %1643 = vmatprep.subr.bf16.mxu0 %v235
    %1644 = vmatpush1.bf16.msra.mxu0 %v234
    %1645 = vmatprep.subr.bf16.mxu0 %v239
    %1646 = vmatpush1.bf16.msra.mxu0 %v238
    %1647 = vmatprep.subr.bf16.mxu0 %v243
    %1648 = vmatpush1.bf16.msra.mxu0 %v242
    %1649 = vmatprep.subr.bf16.mxu0 %v247
    %1650 = vmatpush1.bf16.msra.mxu0 %v246
    %1651 = vmatprep.subr.bf16.mxu0 %v251
    %1652 = vmatpush1.bf16.msra.mxu0 %v250
    %1653 = vmatprep.subr.bf16.mxu0 %v255
    %1654 = vmatpush1.bf16.msra.mxu0 %v254
    %1655 = vmatprep.subr.bf16.mxu0 %v259
    %1656 = vmatpush1.bf16.msra.mxu0 %v258
    %1657 = vmatprep.subr.bf16.mxu0 %v263
    %1658 = vmatpush1.bf16.msra.mxu0 %v262
    %1659 = vmatprep.subr.bf16.mxu0 0
    %1660 = vmatpush1.bf16.msra.mxu0 0
    %1661 = vmatprep.subr.bf16.mxu0 0
    %1662 = vmatpush1.bf16.msra.mxu0 0
    %1663 = vmatprep.subr.bf16.mxu0 0
    %1664 = vmatpush1.bf16.msra.mxu0 0
    %1665 = vmatprep.subr.bf16.mxu0 0
    %1666 = vmatpush1.bf16.msra.mxu0 0
    %1667 = vmatprep.subr.bf16.mxu0 0
    %1668 = vmatpush1.bf16.msra.mxu0 0
    %1669 = vmatprep.subr.bf16.mxu0 0
    %1670 = vmatpush1.bf16.msra.mxu0 0
    %1671 = vmatprep.subr.bf16.mxu0 0
    %1672 = vmatpush1.bf16.msra.mxu0 0
    %1673 = vmatprep.subr.bf16.mxu0 0
    %1674 = vmatpush1.bf16.msra.mxu0 0
    %1675 = vmatprep.mubr.bf16.mxu0 0
    %1676 = vmatmul.mubr.bf16.gmra.mrb[0].mxu0 %v1601
    %v1677 = vpop.f32.mrb[0].mxu0
    %v1678 = vadd.f32 0.0, %v1677
    %v1679 = vpop.f32.mrb[0].mxu0
    %v1680 = vadd.f32 0.0, %v1679
    %v1681 = vpop.f32.mrb[0].mxu0
    %v1682 = vpop.f32.mrb[0].mxu0
    %1683 = vdwg.mxu0
    %1684 = vmatprep.subr.bf16.mxu0 %v475
    %1685 = vmatpush1.bf16.msra.mxu0 %v474
    %1686 = vmatprep.subr.bf16.mxu0 %v479
    %1687 = vmatpush1.bf16.msra.mxu0 %v478
    %1688 = vmatprep.subr.bf16.mxu0 %v483
    %1689 = vmatpush1.bf16.msra.mxu0 %v482
    %1690 = vmatprep.subr.bf16.mxu0 %v487
    %1691 = vmatpush1.bf16.msra.mxu0 %v486
    %1692 = vmatprep.subr.bf16.mxu0 %v491
    %1693 = vmatpush1.bf16.msra.mxu0 %v490
    %1694 = vmatprep.subr.bf16.mxu0 %v495
    %1695 = vmatpush1.bf16.msra.mxu0 %v494
    %1696 = vmatprep.subr.bf16.mxu0 %v499
    %1697 = vmatpush1.bf16.msra.mxu0 %v498
    %1698 = vmatprep.subr.bf16.mxu0 %v503
    %1699 = vmatpush1.bf16.msra.mxu0 %v502
    %1700 = vmatprep.subr.bf16.mxu0 0
    %1701 = vmatpush1.bf16.msra.mxu0 0
    %1702 = vmatprep.subr.bf16.mxu0 0
    %1703 = vmatpush1.bf16.msra.mxu0 0
    %1704 = vmatprep.subr.bf16.mxu0 0
    %1705 = vmatpush1.bf16.msra.mxu0 0
    %1706 = vmatprep.subr.bf16.mxu0 0
    %1707 = vmatpush1.bf16.msra.mxu0 0
    %1708 = vmatprep.subr.bf16.mxu0 0
    %1709 = vmatpush1.bf16.msra.mxu0 0
    %1710 = vmatprep.subr.bf16.mxu0 0
    %1711 = vmatpush1.bf16.msra.mxu0 0
    %1712 = vmatprep.subr.bf16.mxu0 0
    %1713 = vmatpush1.bf16.msra.mxu0 0
    %1714 = vmatprep.subr.bf16.mxu0 0
    %1715 = vmatpush1.bf16.msra.mxu0 0
    %1716 = vmatprep.mubr.bf16.mxu0 0
    %1717 = vmatmul.mubr.bf16.gmra.mrb[0].mxu0 %v1600
    %v1718 = vpop.f32.mrb[0].mxu0
    %v1719 = vadd.f32 %v1637, %v1718
    %v1720 = vpop.f32.mrb[0].mxu0
    %v1721 = vadd.f32 %v1639, %v1720
    %v1722 = vpop.f32.mrb[0].mxu0
    %v1723 = vpop.f32.mrb[0].mxu0
    %1724 = vdwg.mxu0
    %1725 = vmatprep.subr.bf16.mxu0 %v477
    %1726 = vmatpush1.bf16.msra.mxu0 %v476
    %1727 = vmatprep.subr.bf16.mxu0 %v481
    %1728 = vmatpush1.bf16.msra.mxu0 %v480
    %1729 = vmatprep.subr.bf16.mxu0 %v485
    %1730 = vmatpush1.bf16.msra.mxu0 %v484
    %1731 = vmatprep.subr.bf16.mxu0 %v489
    %1732 = vmatpush1.bf16.msra.mxu0 %v488
    %1733 = vmatprep.subr.bf16.mxu0 %v493
    %1734 = vmatpush1.bf16.msra.mxu0 %v492
    %1735 = vmatprep.subr.bf16.mxu0 %v497
    %1736 = vmatpush1.bf16.msra.mxu0 %v496
    %1737 = vmatprep.subr.bf16.mxu0 %v501
    %1738 = vmatpush1.bf16.msra.mxu0 %v500
    %1739 = vmatprep.subr.bf16.mxu0 %v505
    %1740 = vmatpush1.bf16.msra.mxu0 %v504
    %1741 = vmatprep.subr.bf16.mxu0 0
    %1742 = vmatpush1.bf16.msra.mxu0 0
    %1743 = vmatprep.subr.bf16.mxu0 0
    %1744 = vmatpush1.bf16.msra.mxu0 0
    %1745 = vmatprep.subr.bf16.mxu0 0
    %1746 = vmatpush1.bf16.msra.mxu0 0
    %1747 = vmatprep.subr.bf16.mxu0 0
    %1748 = vmatpush1.bf16.msra.mxu0 0
    %1749 = vmatprep.subr.bf16.mxu0 0
    %1750 = vmatpush1.bf16.msra.mxu0 0
    %1751 = vmatprep.subr.bf16.mxu0 0
    %1752 = vmatpush1.bf16.msra.mxu0 0
    %1753 = vmatprep.subr.bf16.mxu0 0
    %1754 = vmatpush1.bf16.msra.mxu0 0
    %1755 = vmatprep.subr.bf16.mxu0 0
    %1756 = vmatpush1.bf16.msra.mxu0 0
    %1757 = vmatprep.mubr.bf16.mxu0 0
    %1758 = vmatmul.mubr.bf16.gmra.mrb[0].mxu0 %v1600
    %v1759 = vpop.f32.mrb[0].mxu0
    %v1760 = vadd.f32 %v1678, %v1759
    %v1761 = vpop.f32.mrb[0].mxu0
    %v1762 = vadd.f32 %v1680, %v1761
    %v1763 = vpop.f32.mrb[0].mxu0
    %v1764 = vpop.f32.mrb[0].mxu0
    %1765 = vdwg.mxu0
    %v1766 = vmul.f32 %v1719, 0.5
    %v1767 = vmul.f32 %v1721, 0.5
    %v1768 = vmul.f32 %v1760, 0.5
    %v1769 = vtanh.pop %v1766
    %v1770 = vtanh.pop %v1767
    %v1771 = vtanh.pop %v1768
    %v1772 = vadd.f32 %v1769, 1.0
    %v1773 = vadd.f32 %v1770, 1.0
    %v1774 = vadd.f32 %v1771, 1.0
    %v1775 = vmul.f32 %v1772, 0.5
    %v1776 = vmul.f32 %v1773, 0.5
    %v1777 = vmul.f32 %v1774, 0.5
    %v1778 = vtanh.pop %v1762
    %v1779 = vmul.f32 %v1776, %v1590
    %v1780 = vmul.f32 %v1775, %v1778
    %v1781 = vadd.f32 %v1779, %v1780
    %v1782 = vtanh.pop %v1781
    %v1783 = vmul.f32 %v1777, %v1782
    %s1784 = scalar_lea.vmem %s0, 56
    %v1785 = vld [vmem:[%s1784] sm:$0xff]
    %1786 = vset.pattern.permute.xlu0 0
    %1787 = vperm.xlu0 %1786, %v1785
    %v1788 = vpop.permute.xlu0 %1787
    %vm1789 = vcmp.eq.s32.totalorder %v1788, %v61
    %v1790 = vsel %vm1789, 1.0, 0.0
    %v1791 = vpack.c.bf16 %v1790, %v1790
    %v1792 = vpack.c.bf16 %v1783, %v1783
    %1793 = vmatprep.subr.bf16.mxu0 %v233
    %1794 = vmatpush1.bf16.msra.mxu0 %v232
    %1795 = vmatprep.subr.bf16.mxu0 %v237
    %1796 = vmatpush1.bf16.msra.mxu0 %v236
    %1797 = vmatprep.subr.bf16.mxu0 %v241
    %1798 = vmatpush1.bf16.msra.mxu0 %v240
    %1799 = vmatprep.subr.bf16.mxu0 %v245
    %1800 = vmatpush1.bf16.msra.mxu0 %v244
    %1801 = vmatprep.subr.bf16.mxu0 %v249
    %1802 = vmatpush1.bf16.msra.mxu0 %v248
    %1803 = vmatprep.subr.bf16.mxu0 %v253
    %1804 = vmatpush1.bf16.msra.mxu0 %v252
    %1805 = vmatprep.subr.bf16.mxu0 %v257
    %1806 = vmatpush1.bf16.msra.mxu0 %v256
    %1807 = vmatprep.subr.bf16.mxu0 %v261
    %1808 = vmatpush1.bf16.msra.mxu0 %v260
    %1809 = vmatprep.subr.bf16.mxu0 0
    %1810 = vmatpush1.bf16.msra.mxu0 0
    %1811 = vmatprep.subr.bf16.mxu0 0
    %1812 = vmatpush1.bf16.msra.mxu0 0
    %1813 = vmatprep.subr.bf16.mxu0 0
    %1814 = vmatpush1.bf16.msra.mxu0 0
    %1815 = vmatprep.subr.bf16.mxu0 0
    %1816 = vmatpush1.bf16.msra.mxu0 0
    %1817 = vmatprep.subr.bf16.mxu0 0
    %1818 = vmatpush1.bf16.msra.mxu0 0
    %1819 = vmatprep.subr.bf16.mxu0 0
    %1820 = vmatpush1.bf16.msra.mxu0 0
    %1821 = vmatprep.subr.bf16.mxu0 0
    %1822 = vmatpush1.bf16.msra.mxu0 0
    %1823 = vmatprep.subr.bf16.mxu0 0
    %1824 = vmatpush1.bf16.msra.mxu0 0
    %1825 = vmatprep.mubr.bf16.mxu0 0
    %1826 = vmatmul.mubr.bf16.gmra.mrb[0].mxu0 %v1792
    %v1827 = vpop.f32.mrb[0].mxu0
    %v1828 = vadd.f32 0.0, %v1827
    %v1829 = vpop.f32.mrb[0].mxu0
    %v1830 = vadd.f32 0.0, %v1829
    %v1831 = vpop.f32.mrb[0].mxu0
    %v1832 = vpop.f32.mrb[0].mxu0
    %1833 = vdwg.mxu0
    %1834 = vmatprep.subr.bf16.mxu0 %v235
    %1835 = vmatpush1.bf16.msra.mxu0 %v234
    %1836 = vmatprep.subr.bf16.mxu0 %v239
    %1837 = vmatpush1.bf16.msra.mxu0 %v238
    %1838 = vmatprep.subr.bf16.mxu0 %v243
    %1839 = vmatpush1.bf16.msra.mxu0 %v242
    %1840 = vmatprep.subr.bf16.mxu0 %v247
    %1841 = vmatpush1.bf16.msra.mxu0 %v246
    %1842 = vmatprep.subr.bf16.mxu0 %v251
    %1843 = vmatpush1.bf16.msra.mxu0 %v250
    %1844 = vmatprep.subr.bf16.mxu0 %v255
    %1845 = vmatpush1.bf16.msra.mxu0 %v254
    %1846 = vmatprep.subr.bf16.mxu0 %v259
    %1847 = vmatpush1.bf16.msra.mxu0 %v258
    %1848 = vmatprep.subr.bf16.mxu0 %v263
    %1849 = vmatpush1.bf16.msra.mxu0 %v262
    %1850 = vmatprep.subr.bf16.mxu0 0
    %1851 = vmatpush1.bf16.msra.mxu0 0
    %1852 = vmatprep.subr.bf16.mxu0 0
    %1853 = vmatpush1.bf16.msra.mxu0 0
    %1854 = vmatprep.subr.bf16.mxu0 0
    %1855 = vmatpush1.bf16.msra.mxu0 0
    %1856 = vmatprep.subr.bf16.mxu0 0
    %1857 = vmatpush1.bf16.msra.mxu0 0
    %1858 = vmatprep.subr.bf16.mxu0 0
    %1859 = vmatpush1.bf16.msra.mxu0 0
    %1860 = vmatprep.subr.bf16.mxu0 0
    %1861 = vmatpush1.bf16.msra.mxu0 0
    %1862 = vmatprep.subr.bf16.mxu0 0
    %1863 = vmatpush1.bf16.msra.mxu0 0
    %1864 = vmatprep.subr.bf16.mxu0 0
    %1865 = vmatpush1.bf16.msra.mxu0 0
    %1866 = vmatprep.mubr.bf16.mxu0 0
    %1867 = vmatmul.mubr.bf16.gmra.mrb[0].mxu0 %v1792
    %v1868 = vpop.f32.mrb[0].mxu0
    %v1869 = vadd.f32 0.0, %v1868
    %v1870 = vpop.f32.mrb[0].mxu0
    %v1871 = vadd.f32 0.0, %v1870
    %v1872 = vpop.f32.mrb[0].mxu0
    %v1873 = vpop.f32.mrb[0].mxu0
    %1874 = vdwg.mxu0
    %1875 = vmatprep.subr.bf16.mxu0 %v475
    %1876 = vmatpush1.bf16.msra.mxu0 %v474
    %1877 = vmatprep.subr.bf16.mxu0 %v479
    %1878 = vmatpush1.bf16.msra.mxu0 %v478
    %1879 = vmatprep.subr.bf16.mxu0 %v483
    %1880 = vmatpush1.bf16.msra.mxu0 %v482
    %1881 = vmatprep.subr.bf16.mxu0 %v487
    %1882 = vmatpush1.bf16.msra.mxu0 %v486
    %1883 = vmatprep.subr.bf16.mxu0 %v491
    %1884 = vmatpush1.bf16.msra.mxu0 %v490
    %1885 = vmatprep.subr.bf16.mxu0 %v495
    %1886 = vmatpush1.bf16.msra.mxu0 %v494
    %1887 = vmatprep.subr.bf16.mxu0 %v499
    %1888 = vmatpush1.bf16.msra.mxu0 %v498
    %1889 = vmatprep.subr.bf16.mxu0 %v503
    %1890 = vmatpush1.bf16.msra.mxu0 %v502
    %1891 = vmatprep.subr.bf16.mxu0 0
    %1892 = vmatpush1.bf16.msra.mxu0 0
    %1893 = vmatprep.subr.bf16.mxu0 0
    %1894 = vmatpush1.bf16.msra.mxu0 0
    %1895 = vmatprep.subr.bf16.mxu0 0
    %1896 = vmatpush1.bf16.msra.mxu0 0
    %1897 = vmatprep.subr.bf16.mxu0 0
    %1898 = vmatpush1.bf16.msra.mxu0 0
    %1899 = vmatprep.subr.bf16.mxu0 0
    %1900 = vmatpush1.bf16.msra.mxu0 0
    %1901 = vmatprep.subr.bf16.mxu0 0
    %1902 = vmatpush1.bf16.msra.mxu0 0
    %1903 = vmatprep.subr.bf16.mxu0 0
    %1904 = vmatpush1.bf16.msra.mxu0 0
    %1905 = vmatprep.subr.bf16.mxu0 0
    %1906 = vmatpush1.bf16.msra.mxu0 0
    %1907 = vmatprep.mubr.bf16.mxu0 0
    %1908 = vmatmul.mubr.bf16.gmra.mrb[0].mxu0 %v1791
    %v1909 = vpop.f32.mrb[0].mxu0
    %v1910 = vadd.f32 %v1828, %v1909
    %v1911 = vpop.f32.mrb[0].mxu0
    %v1912 = vadd.f32 %v1830, %v1911
    %v1913 = vpop.f32.mrb[0].mxu0
    %v1914 = vpop.f32.mrb[0].mxu0
    %1915 = vdwg.mxu0
    %1916 = vmatprep.subr.bf16.mxu0 %v477
    %1917 = vmatpush1.bf16.msra.mxu0 %v476
    %1918 = vmatprep.subr.bf16.mxu0 %v481
    %1919 = vmatpush1.bf16.msra.mxu0 %v480
    %1920 = vmatprep.subr.bf16.mxu0 %v485
    %1921 = vmatpush1.bf16.msra.mxu0 %v484
    %1922 = vmatprep.subr.bf16.mxu0 %v489
    %1923 = vmatpush1.bf16.msra.mxu0 %v488
    %1924 = vmatprep.subr.bf16.mxu0 %v493
    %1925 = vmatpush1.bf16.msra.mxu0 %v492
    %1926 = vmatprep.subr.bf16.mxu0 %v497
    %1927 = vmatpush1.bf16.msra.mxu0 %v496
    %1928 = vmatprep.subr.bf16.mxu0 %v501
    %1929 = vmatpush1.bf16.msra.mxu0 %v500
    %1930 = vmatprep.subr.bf16.mxu0 %v505
    %1931 = vmatpush1.bf16.msra.mxu0 %v504
    %1932 = vmatprep.subr.bf16.mxu0 0
    %1933 = vmatpush1.bf16.msra.mxu0 0
    %1934 = vmatprep.subr.bf16.mxu0 0
    %1935 = vmatpush1.bf16.msra.mxu0 0
    %1936 = vmatprep.subr.bf16.mxu0 0
    %1937 = vmatpush1.bf16.msra.mxu0 0
    %1938 = vmatprep.subr.bf16.mxu0 0
    %1939 = vmatpush1.bf16.msra.mxu0 0
    %1940 = vmatprep.subr.bf16.mxu0 0
    %1941 = vmatpush1.bf16.msra.mxu0 0
    %1942 = vmatprep.subr.bf16.mxu0 0
    %1943 = vmatpush1.bf16.msra.mxu0 0
    %1944 = vmatprep.subr.bf16.mxu0 0
    %1945 = vmatpush1.bf16.msra.mxu0 0
    %1946 = vmatprep.subr.bf16.mxu0 0
    %1947 = vmatpush1.bf16.msra.mxu0 0
    %1948 = vmatprep.mubr.bf16.mxu0 0
    %1949 = vmatmul.mubr.bf16.gmra.mrb[0].mxu0 %v1791
    %v1950 = vpop.f32.mrb[0].mxu0
    %v1951 = vadd.f32 %v1869, %v1950
    %v1952 = vpop.f32.mrb[0].mxu0
    %v1953 = vadd.f32 %v1871, %v1952
    %v1954 = vpop.f32.mrb[0].mxu0
    %v1955 = vpop.f32.mrb[0].mxu0
    %1956 = vdwg.mxu0
    %v1957 = vmul.f32 %v1910, 0.5
    %v1958 = vmul.f32 %v1912, 0.5
    %v1959 = vmul.f32 %v1951, 0.5
    %v1960 = vtanh.pop %v1957
    %v1961 = vtanh.pop %v1958
    %v1962 = vtanh.pop %v1959
    %v1963 = vadd.f32 %v1960, 1.0
    %v1964 = vadd.f32 %v1961, 1.0
    %v1965 = vadd.f32 %v1962, 1.0
    %v1966 = vmul.f32 %v1963, 0.5
    %v1967 = vmul.f32 %v1964, 0.5
    %v1968 = vmul.f32 %v1965, 0.5
    %v1969 = vtanh.pop %v1953
    %v1970 = vmul.f32 %v1967, %v1781
    %v1971 = vmul.f32 %v1966, %v1969
    %v1972 = vadd.f32 %v1970, %v1971
    %v1973 = vtanh.pop %v1972
    %v1974 = vmul.f32 %v1968, %v1973
    %1975 = vst [vmem:[#allocation8] sm:$0xff] %v1974
    %1976 = vst [vmem:[#allocation10] sm:$0xff] %v1972
    %v1977 = vpack.c.bf16 %v1974, %v1974
    %v1978 = vld [vmem:[%s5] sm:$0xf]
    %v1979 = vld [vmem:[%s5 + $0x4] sm:$0xf]
    %v1980 = vld [vmem:[%s5 + $0x8] sm:$0xf]
    %v1981 = vld [vmem:[%s5 + $0xc] sm:$0xf]
    %v1982 = vld [vmem:[%s5 + $0x10] sm:$0xf]
    %v1983 = vld [vmem:[%s5 + $0x14] sm:$0xf]
    %v1984 = vld [vmem:[%s5 + $0x18] sm:$0xf]
    %v1985 = vld [vmem:[%s5 + $0x1c] sm:$0xf]
    %v1986 = vld [vmem:[%s5 + $0x20] sm:$0xf]
    %v1987 = vld [vmem:[%s5 + $0x24] sm:$0xf]
    %v1988 = vld [vmem:[%s5 + $0x28] sm:$0xf]
    %v1989 = vld [vmem:[%s5 + $0x2c] sm:$0xf]
    %v1990 = vld [vmem:[%s5 + $0x30] sm:$0xf]
    %v1991 = vld [vmem:[%s5 + $0x34] sm:$0xf]
    %v1992 = vld [vmem:[%s5 + $0x38] sm:$0xf]
    %v1993 = vld [vmem:[%s5 + $0x3c] sm:$0xf]
    %v1994 = vld [vmem:[%s6] sm:$0x1]
    %v1996 = vlaneseq
    %v1997 = vshrl.u32 %v1996, 7
    %v1998 = vsub.s32 0, %v1997
    %v1999 = vrot.slane %v1994, %v1998
    %v2017 = vunpack.c.l.b16 %v1978
    %v2018 = vunpack.c.l.b16 %v1979
    %v2019 = vunpack.c.l.b16 %v1980
    %v2020 = vunpack.c.l.b16 %v1981
    %v2021 = vunpack.c.l.b16 %v1982
    %v2022 = vunpack.c.l.b16 %v1983
    %v2023 = vunpack.c.l.b16 %v1984
    %v2024 = vunpack.c.l.b16 %v1985
    %v2025 = vunpack.c.l.b16 %v1986
    %v2026 = vunpack.c.l.b16 %v1987
    %v2027 = vunpack.c.l.b16 %v1988
    %v2028 = vunpack.c.l.b16 %v1989
    %v2029 = vunpack.c.l.b16 %v1990
    %v2030 = vunpack.c.l.b16 %v1991
    %v2031 = vunpack.c.l.b16 %v1992
    %v2032 = vunpack.c.l.b16 %v1993
    %v2033 = vpack.c.b16 %v2018, %v2017
    %v2034 = vpack.c.b16 %v2020, %v2019
    %v2035 = vpack.c.b16 %v2022, %v2021
    %v2036 = vpack.c.b16 %v2024, %v2023
    %v2037 = vpack.c.b16 %v2026, %v2025
    %v2038 = vpack.c.b16 %v2028, %v2027
    %v2039 = vpack.c.b16 %v2030, %v2029
    %v2040 = vpack.c.b16 %v2032, %v2031
    %2049 = vmatprep.subr.bf16.mxu0 0
    %2050 = vmatpush1.bf16.msra.mxu0 %v2033
    %2051 = vmatprep.subr.bf16.mxu0 0
    %2052 = vmatpush1.bf16.msra.mxu0 %v2034
    %2053 = vmatprep.subr.bf16.mxu0 0
    %2054 = vmatpush1.bf16.msra.mxu0 %v2035
    %2055 = vmatprep.subr.bf16.mxu0 0
    %2056 = vmatpush1.bf16.msra.mxu0 %v2036
    %2057 = vmatprep.subr.bf16.mxu0 0
    %2058 = vmatpush1.bf16.msra.mxu0 %v2037
    %2059 = vmatprep.subr.bf16.mxu0 0
    %2060 = vmatpush1.bf16.msra.mxu0 %v2038
    %2061 = vmatprep.subr.bf16.mxu0 0
    %2062 = vmatpush1.bf16.msra.mxu0 %v2039
    %2063 = vmatprep.subr.bf16.mxu0 0
    %2064 = vmatpush1.bf16.msra.mxu0 %v2040
    %2065 = vmatprep.subr.bf16.mxu0 0
    %2066 = vmatpush1.bf16.msra.mxu0 0
    %2067 = vmatprep.subr.bf16.mxu0 0
    %2068 = vmatpush1.bf16.msra.mxu0 0
    %2069 = vmatprep.subr.bf16.mxu0 0
    %2070 = vmatpush1.bf16.msra.mxu0 0
    %2071 = vmatprep.subr.bf16.mxu0 0
    %2072 = vmatpush1.bf16.msra.mxu0 0
    %2073 = vmatprep.subr.bf16.mxu0 0
    %2074 = vmatpush1.bf16.msra.mxu0 0
    %2075 = vmatprep.subr.bf16.mxu0 0
    %2076 = vmatpush1.bf16.msra.mxu0 0
    %2077 = vmatprep.subr.bf16.mxu0 0
    %2078 = vmatpush1.bf16.msra.mxu0 0
    %2079 = vmatprep.subr.bf16.mxu0 0
    %2080 = vmatpush1.bf16.msra.mxu0 0
    %2081 = vmatprep.mubr.bf16.mxu0 0
    %2082 = vmatmul.mubr.bf16.gmra.mrb[0].mxu0 %v1977
    %v2083 = vpop.f32.mrb[0].mxu0
    %v2084 = vadd.f32 %v1999, %v2083
    %v2085 = vpop.f32.mrb[0].mxu0
    %v2086 = vpop.f32.mrb[0].mxu0
    %v2087 = vpop.f32.mrb[0].mxu0
    %2088 = vdwg.mxu0
    %2089 = vst [vmem:[#allocation7] sm:$0xff] %v2084
    // Predicated region
    $region38: #{tpu_custom_call.1} parent=1 // pred_check
      _
    $region39: #{tpu_custom_call.1} parent=1 // pred_check_branch
      %2091 = sbr.rel (0) target = $region41
    $region40: #{tpu_custom_call.1} parent=1 // pred_region
      %s2093 = ssub.s32 128, 128
      %2094 = vsyncadd [#allocation4], %s2093
      %s2096 = sshll.u32 [#allocation7], 4
      %s2097 = int_to_ptr.vmem [resolvable:$true] %s2096
      %2099 = dma.vmem_to_hbm [thread:$0]  %s2097, 128, %s7, [#allocation4]
    $region41: #{tpu_custom_call.1} parent=1 // pred_fallthru
      _
    // Predicated region
    $region42: #{tpu_custom_call.1} parent=1 // pred_check
      _
    $region43: #{tpu_custom_call.1} parent=1 // pred_check_branch
      %2101 = sbr.rel (0) target = $region45
    $region44: #{tpu_custom_call.1} parent=1 // pred_region
      %s2103 = ssub.s32 128, 128
      %2104 = vsyncadd [#allocation9], %s2103
      %s2106 = sshll.u32 [#allocation8], 4
      %s2107 = int_to_ptr.vmem [resolvable:$true] %s2106
      %2109 = dma.vmem_to_hbm [thread:$0]  %s2107, 128, %s8, [#allocation9]
    $region45: #{tpu_custom_call.1} parent=1 // pred_fallthru
      _
    // Predicated region
    $region46: #{tpu_custom_call.1} parent=1 // pred_check
      _
    $region47: #{tpu_custom_call.1} parent=1 // pred_check_branch
      %2111 = sbr.rel (0) target = $region49
    $region48: #{tpu_custom_call.1} parent=1 // pred_region
      %s2113 = ssub.s32 128, 128
      %2114 = vsyncadd [#allocation9], %s2113
      %s2116 = sshll.u32 [#allocation10], 4
      %s2117 = int_to_ptr.vmem [resolvable:$true] %s2116
      %2119 = dma.vmem_to_hbm [thread:$0]  %s2117, 128, %s9, [#allocation9]
    $region49: #{tpu_custom_call.1} parent=1 // pred_fallthru
      _
    // Predicated region
    $region50: #{tpu_custom_call.1} parent=1 // pred_check
      _
    $region51: #{tpu_custom_call.1} parent=1 // pred_check_branch
      %2121 = sbr.rel (0) target = $region53
    $region52: #{tpu_custom_call.1} parent=1 // pred_region
      %2122 = dma.done [#allocation4], 128
    $region53: #{tpu_custom_call.1} parent=1 // pred_fallthru
      _
    // Predicated region
    $region54: #{tpu_custom_call.1} parent=1 // pred_check
      _
    $region55: #{tpu_custom_call.1} parent=1 // pred_check_branch
      %2124 = sbr.rel (0) target = $region57
    $region56: #{tpu_custom_call.1} parent=1 // pred_region
      %2125 = dma.done [#allocation9], 128
    $region57: #{tpu_custom_call.1} parent=1 // pred_fallthru
      _
    // Predicated region
    $region58: #{tpu_custom_call.1} parent=1 // pred_check
      _
    $region59: #{tpu_custom_call.1} parent=1 // pred_check_branch
      %2127 = sbr.rel (0) target = $region61
    $region60: #{tpu_custom_call.1} parent=1 // pred_region
      %2128 = dma.done [#allocation9], 128
    $region61: #{tpu_custom_call.1} parent=1 // pred_fallthru
      _
    %2129 = vsyncpa [#allocation3], 1
    %2130 = vsyncpa [#allocation6], 1
    %2131 = vsyncpa [#allocation4], 1
    %2132 = vsyncpa [#allocation9], 1

</llo_original>
